<compile_context>
chip_gen: v7x
topology: tpu7x:2x2x1
jax: 0.10.0
libtpu: 0.0.40
codegen_flags: <defaults>
</compile_context>

<pallas_src>
import jax
import jax.numpy as jnp
from jax.experimental import pallas as pl
from jax.experimental.pallas import tpu as pltpu


# ---------------------------------------------------------------------------
# Fused Bottleneck kernel (one grid step == one batch image)
# ---------------------------------------------------------------------------
def _bottleneck_kernel(x_ref, w1_ref, b1_ref, w2_ref, b2_ref, w3_ref, b3_ref,
                       o_ref, y1p_ref):
    Hp, Wp, width = y1p_ref.shape
    H, Wd = Hp - 2, Wp - 2

    # ---- NCHW block -> pixel-major (H*W, Cin); keep f32 copy for residual.
    x_pm = x_ref[0].T                                           # (H*W, Cin) f32

    # ---- conv1 (1x1, BN1 scale pre-folded) + shift + ReLU.
    y1 = jnp.dot(x_pm.astype(jnp.bfloat16), w1_ref[...],
                 preferred_element_type=jnp.float32)
    y1 = jnp.maximum(y1 + b1_ref[...], 0.0)                     # (H*W, width) f32

    # ---- zero-padded VMEM scratch holds y1 with a 1-pixel halo for the 3x3.
    y1p_ref[...] = jnp.zeros_like(y1p_ref)
    y1p_ref[1:H + 1, 1:Wd + 1, :] = y1.reshape(H, Wd, width)

    # ---- conv2 (3x3, pad=1, BN2 scale pre-folded) as ONE im2col matmul.
    cols = [y1p_ref[kh:kh + H, kw:kw + Wd, :]
            for kh in range(3) for kw in range(3)]
    im2col = jnp.concatenate(cols, axis=-1).reshape(H * Wd, 9 * width)
    y2 = jnp.dot(im2col.astype(jnp.bfloat16), w2_ref[...],
                 preferred_element_type=jnp.float32)
    y2 = jnp.maximum(y2 + b2_ref[...], 0.0)                     # (H*W, width) f32

    # ---- conv3 (1x1, BN3 scale pre-folded) + shift + identity + ReLU.
    y3 = jnp.dot(y2.astype(jnp.bfloat16), w3_ref[...],
                 preferred_element_type=jnp.float32)
    out = jnp.maximum(y3 + b3_ref[...] + x_pm, 0.0)             # (H*W, Cout) f32

    # ---- channels-major again -> lane-dense (Cout, H*W) NCHW output block.
    o_ref[0] = out.T


# ---------------------------------------------------------------------------
# Wrapper
# ---------------------------------------------------------------------------
def bottleneck_forward(x_nchw, params):
    w1, w2, w3, s1, b1, s2, b2, s3, b3 = params
    N, Cin, H, Wd = x_nchw.shape
    width = w1.shape[1]
    Cout = w3.shape[1]
    assert Cin == Cout, "identity shortcut requires inplanes == planes*expansion"

    HW = H * Wd
    x = x_nchw.astype(jnp.float32).reshape(N, Cin, HW)   # free reshape (stays NCHW)

    # Fold BN scale into the conv weights (one-off trace-time XLA ops), bf16 for MXU.
    w1f = (w1 * s1.reshape(1, width)).astype(jnp.bfloat16)
    w2f = (w2 * s2.reshape(1, 1, 1, width)).reshape(9 * width, width).astype(jnp.bfloat16)
    w3f = (w3 * s3.reshape(1, Cout)).astype(jnp.bfloat16)
    b1f = b1.reshape(1, width).astype(jnp.float32)
    b2f = b2.reshape(1, width).astype(jnp.float32)
    b3f = b3.reshape(1, Cout).astype(jnp.float32)

    flops = 2 * N * HW * (Cin * width + 9 * width * width + width * Cout)
    bytes_accessed = (N * Cin * HW * 4 + N * Cout * HW * 4
                      + (w1f.size + w2f.size + w3f.size) * 2
                      + (b1f.size + b2f.size + b3f.size) * 4)

    out = pl.pallas_call(
        _bottleneck_kernel,
        out_shape=jax.ShapeDtypeStruct((N, Cout, HW), jnp.float32),
        grid_spec=pltpu.PrefetchScalarGridSpec(
            num_scalar_prefetch=0,
            grid=(N,),
            in_specs=[
                pl.BlockSpec((1, Cin, HW), lambda n: (n, 0, 0)),
                pl.BlockSpec((Cin, width), lambda n: (0, 0)),
                pl.BlockSpec((1, width), lambda n: (0, 0)),
                pl.BlockSpec((9 * width, width), lambda n: (0, 0)),
                pl.BlockSpec((1, width), lambda n: (0, 0)),
                pl.BlockSpec((width, Cout), lambda n: (0, 0)),
                pl.BlockSpec((1, Cout), lambda n: (0, 0)),
            ],
            out_specs=pl.BlockSpec((1, Cout, HW), lambda n: (n, 0, 0)),
            scratch_shapes=[pltpu.VMEM((H + 2, Wd + 2, width), jnp.float32)],
        ),
        compiler_params=pltpu.CompilerParams(dimension_semantics=("parallel",)),
        cost_estimate=pl.CostEstimate(flops=flops, transcendentals=0,
                                      bytes_accessed=bytes_accessed),
    )(x, w1f, b1f, w2f, b2f, w3f, b3f)

    return out.reshape(N, Cout, H, Wd)


# ---------------------------------------------------------------------------
# Deterministic parameters + pure-JAX reference
# ---------------------------------------------------------------------------
def _bn_fold(c, salt):
    i = jnp.arange(c, dtype=jnp.float32)
    gamma = 1.0 + 0.05 * jnp.cos(i + salt)
    beta = 0.02 * jnp.sin(i + salt)
    mean = 0.01 * i
    var = 1.0 + 0.03 * i
    scale = gamma * jax.lax.rsqrt(var + 1e-5)
    shift = beta - mean * scale
    return scale.astype(jnp.float32), shift.astype(jnp.float32)


def make_params(key, inplanes, planes):
    width = planes              # base_width=64, groups=1
    cout = planes * 4           # expansion = 4
    k1, k2, k3 = jax.random.split(key, 3)
    w1 = 0.1 * jax.random.normal(k1, (inplanes, width), jnp.float32)
    w2 = 0.1 * jax.random.normal(k2, (3, 3, width, width), jnp.float32)   # (kh,kw,cin,cout)
    w3 = 0.1 * jax.random.normal(k3, (width, cout), jnp.float32)
    s1, b1 = _bn_fold(width, 0.0)
    s2, b2 = _bn_fold(width, 1.0)
    s3, b3 = _bn_fold(cout, 2.0)
    return (w1, w2, w3, s1, b1, s2, b2, s3, b3)


def reference(x_nchw, params, *, mxu_dtype=jnp.float32):
    """Module-semantics reference.  mxu_dtype=bfloat16 emulates the kernel's
    mixed precision (bf16 operands, f32 accumulation) for a tight comparison."""
    w1, w2, w3, s1, b1, s2, b2, s3, b3 = params
    w1f = (w1 * s1[None, :]).astype(mxu_dtype)
    w2f = (w2 * s2[None, None, None, :]).astype(mxu_dtype)
    w3f = (w3 * s3[None, :]).astype(mxu_dtype)

    x = jnp.transpose(x_nchw, (0, 2, 3, 1)).astype(jnp.float32)   # NHWC
    y = jnp.einsum('nhwc,cd->nhwd', x.astype(mxu_dtype), w1f,
                   preferred_element_type=jnp.float32)
    y = jnp.maximum(y + b1, 0.0)
    y = jax.lax.conv_general_dilated(
        y.astype(mxu_dtype), w2f, window_strides=(1, 1), padding='SAME',
        dimension_numbers=('NHWC', 'HWIO', 'NHWC'),
        preferred_element_type=jnp.float32)
    y = jnp.maximum(y + b2, 0.0)
    y = jnp.einsum('nhwc,cd->nhwd', y.astype(mxu_dtype), w3f,
                   preferred_element_type=jnp.float32) + b3
    y = jnp.maximum(y + x, 0.0)
    return jnp.transpose(y, (0, 3, 1, 2))


if __name__ == "__main__":
    N, inplanes, planes = 2, 64, 16          # width=16, Cout=64 == inplanes (identity path)
    H = Wd = 16

    key = jax.random.PRNGKey(0)
    kx, kp = jax.random.split(key)
    x = jax.random.normal(kx, (N, inplanes, H, Wd), jnp.float32)
    params = make_params(kp, inplanes, planes)

    out = jax.block_until_ready(bottleneck_forward(x, params))
    assert out.shape == (N, planes * 4, H, Wd)

    ref_mixed = reference(x, params, mxu_dtype=jnp.bfloat16)   # same precision as kernel
    ref_f32 = reference(x, params, mxu_dtype=jnp.float32)      # pure-f32 module semantics
    assert jnp.allclose(out, ref_mixed, atol=2e-3, rtol=2e-3), "mismatch vs mixed-precision reference"
    assert jnp.allclose(out, ref_f32, atol=5e-2, rtol=5e-2), "mismatch vs f32 reference"
    print("KERNEL_OK")
</pallas_src>

<mosaic_0001>
module attributes {stable_mosaic.version = 11 : i64} {
  func.func @_bottleneck_kernel(%arg0: i32, %arg1: memref<1x64x256xf32, #tpu.memory_space<vmem>>, %arg2: memref<64x16xbf16, #tpu.memory_space<vmem>>, %arg3: memref<1x16xf32, #tpu.memory_space<vmem>>, %arg4: memref<144x16xbf16, #tpu.memory_space<vmem>>, %arg5: memref<1x16xf32, #tpu.memory_space<vmem>>, %arg6: memref<16x64xbf16, #tpu.memory_space<vmem>>, %arg7: memref<1x64xf32, #tpu.memory_space<vmem>>, %arg8: memref<1x64x256xf32, #tpu.memory_space<vmem>>, %arg9: memref<18x18x16xf32, #tpu.memory_space<vmem>>) attributes {dimension_semantics = [#tpu.dimension_semantics<parallel>], iteration_bounds = array<i64: 2>, scalar_prefetch = 0 : i64, scratch_operands = 1 : i64, tpu.core_type = #tpu.core_type<tc>, window_params = [{transform_indices = @transform_0, window_bounds = array<i64: 1, 64, 256>}, {pipeline_mode = #tpu.pipeline_mode<synchronous>, transform_indices = @transform_1, window_bounds = array<i64: 64, 16>}, {pipeline_mode = #tpu.pipeline_mode<synchronous>, transform_indices = @transform_2, window_bounds = array<i64: 1, 16>}, {pipeline_mode = #tpu.pipeline_mode<synchronous>, transform_indices = @transform_3, window_bounds = array<i64: 144, 16>}, {pipeline_mode = #tpu.pipeline_mode<synchronous>, transform_indices = @transform_4, window_bounds = array<i64: 1, 16>}, {pipeline_mode = #tpu.pipeline_mode<synchronous>, transform_indices = @transform_5, window_bounds = array<i64: 16, 64>}, {pipeline_mode = #tpu.pipeline_mode<synchronous>, transform_indices = @transform_6, window_bounds = array<i64: 1, 64>}, {transform_indices = @transform_7, window_bounds = array<i64: 1, 64, 256>}]} {
    %c0 = arith.constant 0 : index
    %c0_0 = arith.constant 0 : index
    %c0_1 = arith.constant 0 : index
    %0 = vector.load %arg1[%c0, %c0_0, %c0_1] : memref<1x64x256xf32, #tpu.memory_space<vmem>>, vector<1x64x256xf32>
    %1 = vector.shape_cast %0 : vector<1x64x256xf32> to vector<64x256xf32>
    %2 = tpu.transpose %1, [1, 0] : vector<64x256xf32> -> vector<256x64xf32>
    %3 = arith.truncf %2 : vector<256x64xf32> to vector<256x64xbf16>
    %c0_2 = arith.constant 0 : index
    %c0_3 = arith.constant 0 : index
    %4 = vector.load %arg2[%c0_2, %c0_3] : memref<64x16xbf16, #tpu.memory_space<vmem>>, vector<64x16xbf16>
    %cst = arith.constant dense<0.000000e+00> : vector<256x16xf32>
    %5 = tpu.matmul %3, %4, %cst {dimension_numbers = #tpu.dot_dimension_numbers<[1], [0], [0], [1], [0, 0, 1, 1], [], []>} : vector<256x64xbf16>, vector<64x16xbf16>, vector<256x16xf32> -> vector<256x16xf32>
    %c0_4 = arith.constant 0 : index
    %c0_5 = arith.constant 0 : index
    %6 = vector.load %arg3[%c0_4, %c0_5] : memref<1x16xf32, #tpu.memory_space<vmem>>, vector<1x16xf32>
    %7 = vector.broadcast %6 : vector<1x16xf32> to vector<256x16xf32>
    %8 = arith.addf %5, %7 : vector<256x16xf32>
    %cst_6 = arith.constant 0.000000e+00 : f32
    %9 = vector.broadcast %cst_6 : f32 to vector<256x16xf32>
    %10 = arith.maximumf %8, %9 : vector<256x16xf32>
    %cst_7 = arith.constant 0.000000e+00 : f32
    %11 = vector.broadcast %cst_7 : f32 to vector<18x18x16xf32>
    %c0_8 = arith.constant 0 : index
    %c0_9 = arith.constant 0 : index
    %c0_10 = arith.constant 0 : index
    %12 = vector.load %arg9[%c0_8, %c0_9, %c0_10] : memref<18x18x16xf32, #tpu.memory_space<vmem>>, vector<18x18x16xf32>
    tpu.vector_store %arg9[%c0_8, %c0_9, %c0_10], %11 {strides = array<i32>} : memref<18x18x16xf32, #tpu.memory_space<vmem>>, vector<18x18x16xf32>,
    %13 = vector.shape_cast %10 : vector<256x16xf32> to vector<16x16x16xf32>
    %c1 = arith.constant 1 : index
    %c1_11 = arith.constant 1 : index
    %c0_12 = arith.constant 0 : index
    %14 = vector.load %arg9[%c1, %c1_11, %c0_12] : memref<18x18x16xf32, #tpu.memory_space<vmem>>, vector<16x16x16xf32>
    tpu.vector_store %arg9[%c1, %c1_11, %c0_12], %13 {strides = array<i32>} : memref<18x18x16xf32, #tpu.memory_space<vmem>>, vector<16x16x16xf32>,
    %c0_13 = arith.constant 0 : index
    %c0_14 = arith.constant 0 : index
    %c0_15 = arith.constant 0 : index
    %15 = vector.load %arg9[%c0_13, %c0_14, %c0_15] : memref<18x18x16xf32, #tpu.memory_space<vmem>>, vector<16x16x16xf32>
    %c0_16 = arith.constant 0 : index
    %c1_17 = arith.constant 1 : index
    %c0_18 = arith.constant 0 : index
    %16 = vector.load %arg9[%c0_16, %c1_17, %c0_18] : memref<18x18x16xf32, #tpu.memory_space<vmem>>, vector<16x16x16xf32>
    %c0_19 = arith.constant 0 : index
    %c2 = arith.constant 2 : index
    %c0_20 = arith.constant 0 : index
    %17 = vector.load %arg9[%c0_19, %c2, %c0_20] : memref<18x18x16xf32, #tpu.memory_space<vmem>>, vector<16x16x16xf32>
    %c1_21 = arith.constant 1 : index
    %c0_22 = arith.constant 0 : index
    %c0_23 = arith.constant 0 : index
    %18 = vector.load %arg9[%c1_21, %c0_22, %c0_23] : memref<18x18x16xf32, #tpu.memory_space<vmem>>, vector<16x16x16xf32>
    %c1_24 = arith.constant 1 : index
    %c1_25 = arith.constant 1 : index
    %c0_26 = arith.constant 0 : index
    %19 = vector.load %arg9[%c1_24, %c1_25, %c0_26] : memref<18x18x16xf32, #tpu.memory_space<vmem>>, vector<16x16x16xf32>
    %c1_27 = arith.constant 1 : index
    %c2_28 = arith.constant 2 : index
    %c0_29 = arith.constant 0 : index
    %20 = vector.load %arg9[%c1_27, %c2_28, %c0_29] : memref<18x18x16xf32, #tpu.memory_space<vmem>>, vector<16x16x16xf32>
    %c2_30 = arith.constant 2 : index
    %c0_31 = arith.constant 0 : index
    %c0_32 = arith.constant 0 : index
    %21 = vector.load %arg9[%c2_30, %c0_31, %c0_32] : memref<18x18x16xf32, #tpu.memory_space<vmem>>, vector<16x16x16xf32>
    %c2_33 = arith.constant 2 : index
    %c1_34 = arith.constant 1 : index
    %c0_35 = arith.constant 0 : index
    %22 = vector.load %arg9[%c2_33, %c1_34, %c0_35] : memref<18x18x16xf32, #tpu.memory_space<vmem>>, vector<16x16x16xf32>
    %c2_36 = arith.constant 2 : index
    %c2_37 = arith.constant 2 : index
    %c0_38 = arith.constant 0 : index
    %23 = vector.load %arg9[%c2_36, %c2_37, %c0_38] : memref<18x18x16xf32, #tpu.memory_space<vmem>>, vector<16x16x16xf32>
    %24 = tpu.concatenate %15, %16, %17, %18, %19, %20, %21, %22, %23 in 2 : vector<16x16x16xf32>, vector<16x16x16xf32>, vector<16x16x16xf32>, vector<16x16x16xf32>, vector<16x16x16xf32>, vector<16x16x16xf32>, vector<16x16x16xf32>, vector<16x16x16xf32>, vector<16x16x16xf32> -> vector<16x16x144xf32>
    %25 = vector.shape_cast %24 : vector<16x16x144xf32> to vector<256x144xf32>
    %26 = arith.truncf %25 : vector<256x144xf32> to vector<256x144xbf16>
    %c0_39 = arith.constant 0 : index
    %c0_40 = arith.constant 0 : index
    %27 = vector.load %arg4[%c0_39, %c0_40] : memref<144x16xbf16, #tpu.memory_space<vmem>>, vector<144x16xbf16>
    %cst_41 = arith.constant dense<0.000000e+00> : vector<256x16xf32>
    %28 = tpu.matmul %26, %27, %cst_41 {dimension_numbers = #tpu.dot_dimension_numbers<[1], [0], [0], [1], [0, 0, 1, 1], [], []>} : vector<256x144xbf16>, vector<144x16xbf16>, vector<256x16xf32> -> vector<256x16xf32>
    %c0_42 = arith.constant 0 : index
    %c0_43 = arith.constant 0 : index
    %29 = vector.load %arg5[%c0_42, %c0_43] : memref<1x16xf32, #tpu.memory_space<vmem>>, vector<1x16xf32>
    %30 = vector.broadcast %29 : vector<1x16xf32> to vector<256x16xf32>
    %31 = arith.addf %28, %30 : vector<256x16xf32>
    %cst_44 = arith.constant 0.000000e+00 : f32
    %32 = vector.broadcast %cst_44 : f32 to vector<256x16xf32>
    %33 = arith.maximumf %31, %32 : vector<256x16xf32>
    %34 = arith.truncf %33 : vector<256x16xf32> to vector<256x16xbf16>
    %c0_45 = arith.constant 0 : index
    %c0_46 = arith.constant 0 : index
    %35 = vector.load %arg6[%c0_45, %c0_46] : memref<16x64xbf16, #tpu.memory_space<vmem>>, vector<16x64xbf16>
    %cst_47 = arith.constant dense<0.000000e+00> : vector<256x64xf32>
    %36 = tpu.matmul %34, %35, %cst_47 {dimension_numbers = #tpu.dot_dimension_numbers<[1], [0], [0], [1], [0, 0, 1, 1], [], []>} : vector<256x16xbf16>, vector<16x64xbf16>, vector<256x64xf32> -> vector<256x64xf32>
    %c0_48 = arith.constant 0 : index
    %c0_49 = arith.constant 0 : index
    %37 = vector.load %arg7[%c0_48, %c0_49] : memref<1x64xf32, #tpu.memory_space<vmem>>, vector<1x64xf32>
    %38 = vector.broadcast %37 : vector<1x64xf32> to vector<256x64xf32>
    %39 = arith.addf %36, %38 : vector<256x64xf32>
    %40 = arith.addf %39, %2 : vector<256x64xf32>
    %cst_50 = arith.constant 0.000000e+00 : f32
    %41 = vector.broadcast %cst_50 : f32 to vector<256x64xf32>
    %42 = arith.maximumf %40, %41 : vector<256x64xf32>
    %43 = tpu.transpose %42, [1, 0] : vector<256x64xf32> -> vector<64x256xf32>
    %c0_51 = arith.constant 0 : index
    %c0_52 = arith.constant 0 : index
    %c0_53 = arith.constant 0 : index
    %44 = vector.load %arg8[%c0_51, %c0_52, %c0_53] : memref<1x64x256xf32, #tpu.memory_space<vmem>>, vector<1x64x256xf32>
    %45 = vector.shape_cast %44 : vector<1x64x256xf32> to vector<64x256xf32>
    %46 = vector.shape_cast %43 : vector<64x256xf32> to vector<1x64x256xf32>
    tpu.vector_store %arg8[%c0_51, %c0_52, %c0_53], %46 {strides = array<i32>} : memref<1x64x256xf32, #tpu.memory_space<vmem>>, vector<1x64x256xf32>,
    return
  }
  func.func @transform_0(%arg0: i32) -> (i32, i32, i32) {
    %c0_i32 = arith.constant 0 : i32
    %c0_i32_0 = arith.constant 0 : i32
    %c0_i32_1 = arith.constant 0 : i32
    return %arg0, %c0_i32, %c0_i32_0 : i32, i32, i32
  }
  func.func @transform_1(%arg0: i32) -> (i32, i32) {
    %c0_i32 = arith.constant 0 : i32
    %c0_i32_0 = arith.constant 0 : i32
    %c0_i32_1 = arith.constant 0 : i32
    return %c0_i32, %c0_i32_0 : i32, i32
  }
  func.func @transform_2(%arg0: i32) -> (i32, i32) {
    %c0_i32 = arith.constant 0 : i32
    %c0_i32_0 = arith.constant 0 : i32
    %c0_i32_1 = arith.constant 0 : i32
    return %c0_i32, %c0_i32_0 : i32, i32
  }
  func.func @transform_3(%arg0: i32) -> (i32, i32) {
    %c0_i32 = arith.constant 0 : i32
    %c0_i32_0 = arith.constant 0 : i32
    %c0_i32_1 = arith.constant 0 : i32
    return %c0_i32, %c0_i32_0 : i32, i32
  }
  func.func @transform_4(%arg0: i32) -> (i32, i32) {
    %c0_i32 = arith.constant 0 : i32
    %c0_i32_0 = arith.constant 0 : i32
    %c0_i32_1 = arith.constant 0 : i32
    return %c0_i32, %c0_i32_0 : i32, i32
  }
  func.func @transform_5(%arg0: i32) -> (i32, i32) {
    %c0_i32 = arith.constant 0 : i32
    %c0_i32_0 = arith.constant 0 : i32
    %c0_i32_1 = arith.constant 0 : i32
    return %c0_i32, %c0_i32_0 : i32, i32
  }
  func.func @transform_6(%arg0: i32) -> (i32, i32) {
    %c0_i32 = arith.constant 0 : i32
    %c0_i32_0 = arith.constant 0 : i32
    %c0_i32_1 = arith.constant 0 : i32
    return %c0_i32, %c0_i32_0 : i32, i32
  }
  func.func @transform_7(%arg0: i32) -> (i32, i32, i32) {
    %c0_i32 = arith.constant 0 : i32
    %c0_i32_0 = arith.constant 0 : i32
    %c0_i32_1 = arith.constant 0 : i32
    return %arg0, %c0_i32, %c0_i32_0 : i32, i32, i32
  }
}

</mosaic_0001>

<llo_original>
// kernel: tpu_custom_call.1
$region0: #{tpu_custom_call.1}
  #allocation0 [shape = 'u32[]', space=smem, size = 0x4, offset = 0x4, fixed_abs, tag = 'smem constant byte address 0x4 - core index']
  #allocation1 [shape = 'u32[144,128]{1,0:T(1,128)}', space=vmem, size = 0x12000, scoped, tag = 'internal scratch']
  #allocation2 [shape = 'f32[18,18,16]{2,1,0:T(8,128)}', space=vmem, size = 0x36000, scoped, tag = 'scratch operand']
  %s0 = inlined_call_operand.hbm [shape: f32[2,64,256], index: 0, kind: input, shape index: {}]
  %s1 = inlined_call_operand.vmem [shape: bf16[64,16], index: 1, kind: input, shape index: {}]
  %s2 = inlined_call_operand.vmem [shape: f32[1,16], index: 2, kind: input, shape index: {}]
  %s3 = inlined_call_operand.vmem [shape: bf16[144,16], index: 3, kind: input, shape index: {}]
  %s4 = inlined_call_operand.vmem [shape: f32[1,16], index: 4, kind: input, shape index: {}]
  %s5 = inlined_call_operand.vmem [shape: bf16[16,64], index: 5, kind: input, shape index: {}]
  %s6 = inlined_call_operand.vmem [shape: f32[1,64], index: 6, kind: input, shape index: {}]
  %s7 = inlined_call_operand.hbm [shape: f32[2,64,256], index: 7, kind: output, shape index: {}]
  %s8 = sld [smem:[#allocation0]]
  $region65: #{tpu_custom_call.1} parent=0
    _
  %s10 = ssub.s32 1, %s8
  %s11 = scalar_select 0, %s10, %s8
  $region1: #{tpu_custom_call.1} parent=0
    #allocation3 [shape = 'u8[131072]{0}', space=vmem, size = 0x20000, scoped, tag = 'input window, operand 0']
    #allocation4 [shape = 's32[2]{0}', space=sflag, size = 0x8, scoped, tag = 'scoped memory for tpu_custom_call.1']
    #allocation5 [shape = 's32[2]{0}', space=sflag, size = 0x8, scoped, tag = 'scoped memory for tpu_custom_call.1']
    #allocation6 [shape = 'u8[131072]{0}', space=vmem, size = 0x20000, scoped, tag = 'output window, operand 0']
    %12 = vsyncpa [#allocation4], 0
    %s13 = scalar_lea.sflag [#allocation4], 1
    %14 = vsyncpa %s13, 0
    %15 = vsyncpa [#allocation5], 0
    %s16 = scalar_lea.sflag [#allocation5], 1
    %17 = vsyncpa %s16, 0
    loop: start=0, step=1, limit=4
    $region2: #{tpu_custom_call.1} parent=1 // loop_pre_header
      _
    $region3: #{tpu_custom_call.1} parent=1 // loop_header
      %s19 = sphi 0, %s23
      %p20 = scmp.ge.s32.totalorder %s19, 4
      %s29 = sphi 0, %s31
      %s32 = sphi 0, %s29
      %s33 = sphi 0, %s32
      %s49 = sphi 0, %s33
      %s53 = sphi 0, %s53
      %s55 = sphi 0, %s53
      %s56 = sphi 0, %s55
      %s70 = sphi 0, %s56
      %s74 = sphi 0, %s74
      %s76 = sphi 0, %s74
      %s77 = sphi 0, %s76
      %s91 = sphi 0, %s77
      %s95 = sphi 0, %s95
      %s97 = sphi 0, %s95
      %s98 = sphi 0, %s97
      %s112 = sphi 0, %s98
      %s116 = sphi 0, %s116
      %s118 = sphi 0, %s116
      %s119 = sphi 0, %s118
      %s133 = sphi 0, %s119
      %s137 = sphi 0, %s137
      %s139 = sphi 0, %s137
      %s140 = sphi 0, %s139
      %s154 = sphi 0, %s140
      %s158 = sphi 0, %s158
      %s160 = sphi 0, %s158
      %s161 = sphi 0, %s160
      %s175 = sphi 0, %s161
      %s181 = sphi 0, %s183
      %s184 = sphi 0, %s181
      %s185 = sphi 0, %s184
      %s201 = sphi 0, %s185
    $region4: #{tpu_custom_call.1} parent=1 // loop_header_branch
      %22 = sbr.rel (%p20) target = $region8
    $region5: #{tpu_custom_call.1} parent=1 // loop_body
      %s24 = ssub.s32 %s19, 1
      %s25 = ssub.s32 %s19, 2
      %s26 = sadd.s32 %s19, 1
      %s27 = ssub.s32 %s19, %s26
      %p28 = scmp.eq.s32.totalorder %s27, 0
      %s30 = sadd.s32 %s29, 1
      %s31 = scalar_select %p28, %s29, %s30
      %p34 = pneg %p28
      %p35 = scmp.eq.s32.totalorder %s19, 1
      %p36 = por %p34, %p35
      %p37 = scmp.ne.s32.totalorder %s29, %s32
      %p38 = scmp.eq.s32.totalorder %s19, 0
      %p39 = por %p37, %p38
      %p40 = scmp.ne.s32.totalorder %s29, %s32
      %p41 = scmp.eq.s32.totalorder %s24, 1
      %p42 = por %p40, %p41
      %p43 = scmp.ne.s32.totalorder %s32, %s33
      %p44 = scmp.eq.s32.totalorder %s24, 0
      %p45 = por %p43, %p44
      %p46 = scmp.ne.s32.totalorder %s32, %s33
      %p47 = scmp.eq.s32.totalorder %s25, 1
      %p48 = por %p46, %p47
      %p50 = scmp.ne.s32.totalorder %s33, %s49
      %p51 = scmp.eq.s32.totalorder %s25, 0
      %p52 = por %p50, %p51
      %s54 = sadd.s32 %s53, 1
      %p57 = scmp.eq.s32.totalorder %s19, 1
      %p58 = scmp.ne.s32.totalorder %s53, %s55
      %p59 = scmp.eq.s32.totalorder %s19, 0
      %p60 = por %p58, %p59
      %p61 = scmp.ne.s32.totalorder %s53, %s55
      %p62 = scmp.eq.s32.totalorder %s24, 1
      %p63 = por %p61, %p62
      %p64 = scmp.ne.s32.totalorder %s55, %s56
      %p65 = scmp.eq.s32.totalorder %s24, 0
      %p66 = por %p64, %p65
      %p67 = scmp.ne.s32.totalorder %s55, %s56
      %p68 = scmp.eq.s32.totalorder %s25, 1
      %p69 = por %p67, %p68
      %p71 = scmp.ne.s32.totalorder %s56, %s70
      %p72 = scmp.eq.s32.totalorder %s25, 0
      %p73 = por %p71, %p72
      %s75 = sadd.s32 %s74, 1
      %p78 = scmp.eq.s32.totalorder %s19, 1
      %p79 = scmp.ne.s32.totalorder %s74, %s76
      %p80 = scmp.eq.s32.totalorder %s19, 0
      %p81 = por %p79, %p80
      %p82 = scmp.ne.s32.totalorder %s74, %s76
      %p83 = scmp.eq.s32.totalorder %s24, 1
      %p84 = por %p82, %p83
      %p85 = scmp.ne.s32.totalorder %s76, %s77
      %p86 = scmp.eq.s32.totalorder %s24, 0
      %p87 = por %p85, %p86
      %p88 = scmp.ne.s32.totalorder %s76, %s77
      %p89 = scmp.eq.s32.totalorder %s25, 1
      %p90 = por %p88, %p89
      %p92 = scmp.ne.s32.totalorder %s77, %s91
      %p93 = scmp.eq.s32.totalorder %s25, 0
      %p94 = por %p92, %p93
      %s96 = sadd.s32 %s95, 1
      %p99 = scmp.eq.s32.totalorder %s19, 1
      %p100 = scmp.ne.s32.totalorder %s95, %s97
      %p101 = scmp.eq.s32.totalorder %s19, 0
      %p102 = por %p100, %p101
      %p103 = scmp.ne.s32.totalorder %s95, %s97
      %p104 = scmp.eq.s32.totalorder %s24, 1
      %p105 = por %p103, %p104
      %p106 = scmp.ne.s32.totalorder %s97, %s98
      %p107 = scmp.eq.s32.totalorder %s24, 0
      %p108 = por %p106, %p107
      %p109 = scmp.ne.s32.totalorder %s97, %s98
      %p110 = scmp.eq.s32.totalorder %s25, 1
      %p111 = por %p109, %p110
      %p113 = scmp.ne.s32.totalorder %s98, %s112
      %p114 = scmp.eq.s32.totalorder %s25, 0
      %p115 = por %p113, %p114
      %s117 = sadd.s32 %s116, 1
      %p120 = scmp.eq.s32.totalorder %s19, 1
      %p121 = scmp.ne.s32.totalorder %s116, %s118
      %p122 = scmp.eq.s32.totalorder %s19, 0
      %p123 = por %p121, %p122
      %p124 = scmp.ne.s32.totalorder %s116, %s118
      %p125 = scmp.eq.s32.totalorder %s24, 1
      %p126 = por %p124, %p125
      %p127 = scmp.ne.s32.totalorder %s118, %s119
      %p128 = scmp.eq.s32.totalorder %s24, 0
      %p129 = por %p127, %p128
      %p130 = scmp.ne.s32.totalorder %s118, %s119
      %p131 = scmp.eq.s32.totalorder %s25, 1
      %p132 = por %p130, %p131
      %p134 = scmp.ne.s32.totalorder %s119, %s133
      %p135 = scmp.eq.s32.totalorder %s25, 0
      %p136 = por %p134, %p135
      %s138 = sadd.s32 %s137, 1
      %p141 = scmp.eq.s32.totalorder %s19, 1
      %p142 = scmp.ne.s32.totalorder %s137, %s139
      %p143 = scmp.eq.s32.totalorder %s19, 0
      %p144 = por %p142, %p143
      %p145 = scmp.ne.s32.totalorder %s137, %s139
      %p146 = scmp.eq.s32.totalorder %s24, 1
      %p147 = por %p145, %p146
      %p148 = scmp.ne.s32.totalorder %s139, %s140
      %p149 = scmp.eq.s32.totalorder %s24, 0
      %p150 = por %p148, %p149
      %p151 = scmp.ne.s32.totalorder %s139, %s140
      %p152 = scmp.eq.s32.totalorder %s25, 1
      %p153 = por %p151, %p152
      %p155 = scmp.ne.s32.totalorder %s140, %s154
      %p156 = scmp.eq.s32.totalorder %s25, 0
      %p157 = por %p155, %p156
      %s159 = sadd.s32 %s158, 1
      %p162 = scmp.eq.s32.totalorder %s19, 1
      %p163 = scmp.ne.s32.totalorder %s158, %s160
      %p164 = scmp.eq.s32.totalorder %s19, 0
      %p165 = por %p163, %p164
      %p166 = scmp.ne.s32.totalorder %s158, %s160
      %p167 = scmp.eq.s32.totalorder %s24, 1
      %p168 = por %p166, %p167
      %p169 = scmp.ne.s32.totalorder %s160, %s161
      %p170 = scmp.eq.s32.totalorder %s24, 0
      %p171 = por %p169, %p170
      %p172 = scmp.ne.s32.totalorder %s160, %s161
      %p173 = scmp.eq.s32.totalorder %s25, 1
      %p174 = por %p172, %p173
      %p176 = scmp.ne.s32.totalorder %s161, %s175
      %p177 = scmp.eq.s32.totalorder %s25, 0
      %p178 = por %p176, %p177
      %s179 = ssub.s32 %s19, %s26
      %p180 = scmp.eq.s32.totalorder %s179, 0
      %s182 = sadd.s32 %s181, 1
      %s183 = scalar_select %p180, %s181, %s182
      %p186 = pneg %p180
      %p187 = scmp.eq.s32.totalorder %s19, 1
      %p188 = por %p186, %p187
      %p189 = scmp.ne.s32.totalorder %s181, %s184
      %p190 = scmp.eq.s32.totalorder %s19, 0
      %p191 = por %p189, %p190
      %p192 = scmp.ne.s32.totalorder %s181, %s184
      %p193 = scmp.eq.s32.totalorder %s24, 1
      %p194 = por %p192, %p193
      %p195 = scmp.ne.s32.totalorder %s184, %s185
      %p196 = scmp.eq.s32.totalorder %s24, 0
      %p197 = por %p195, %p196
      %p198 = scmp.ne.s32.totalorder %s184, %s185
      %p199 = scmp.eq.s32.totalorder %s25, 1
      %p200 = por %p198, %p199
      %p202 = scmp.ne.s32.totalorder %s185, %s201
      %p203 = scmp.eq.s32.totalorder %s25, 0
      %p204 = por %p202, %p203
      %p205 = scmp.le.s32.totalorder 1, %s19
      %p206 = scmp.lt.s32.totalorder %s19, 3
      %p207 = pnand %p205, %p206
      %p208 = pneg %p207
      // Predicated region
      $region9: #{tpu_custom_call.1} parent=5 // pred_check
        _
      $region10: #{tpu_custom_call.1} parent=5 // pred_check_branch
        %210 = sbr.rel (%p207) target = $region12
      $region11: #{tpu_custom_call.1} parent=5 // pred_region
        %s211 = ssub.s32 %s19, 1
        // Predicated region
        $region13: #{tpu_custom_call.1} parent=11 // pred_check
          %p212 = pneg %p66
        $region14: #{tpu_custom_call.1} parent=11 // pred_check_branch
          %214 = sbr.rel (%p212) target = $region16
        $region15: #{tpu_custom_call.1} parent=11 // pred_region
          _
        $region16: #{tpu_custom_call.1} parent=11 // pred_fallthru
          _
        // Predicated region
        $region17: #{tpu_custom_call.1} parent=11 // pred_check
          %p215 = pneg %p87
        $region18: #{tpu_custom_call.1} parent=11 // pred_check_branch
          %217 = sbr.rel (%p215) target = $region20
        $region19: #{tpu_custom_call.1} parent=11 // pred_region
          _
        $region20: #{tpu_custom_call.1} parent=11 // pred_fallthru
          _
        // Predicated region
        $region21: #{tpu_custom_call.1} parent=11 // pred_check
          %p218 = pneg %p108
        $region22: #{tpu_custom_call.1} parent=11 // pred_check_branch
          %220 = sbr.rel (%p218) target = $region24
        $region23: #{tpu_custom_call.1} parent=11 // pred_region
          _
        $region24: #{tpu_custom_call.1} parent=11 // pred_fallthru
          _
        // Predicated region
        $region25: #{tpu_custom_call.1} parent=11 // pred_check
          %p221 = pneg %p129
        $region26: #{tpu_custom_call.1} parent=11 // pred_check_branch
          %223 = sbr.rel (%p221) target = $region28
        $region27: #{tpu_custom_call.1} parent=11 // pred_region
          _
        $region28: #{tpu_custom_call.1} parent=11 // pred_fallthru
          _
        // Predicated region
        $region29: #{tpu_custom_call.1} parent=11 // pred_check
          %p224 = pneg %p150
        $region30: #{tpu_custom_call.1} parent=11 // pred_check_branch
          %226 = sbr.rel (%p224) target = $region32
        $region31: #{tpu_custom_call.1} parent=11 // pred_region
          _
        $region32: #{tpu_custom_call.1} parent=11 // pred_fallthru
          _
        // Predicated region
        $region33: #{tpu_custom_call.1} parent=11 // pred_check
          %p227 = pneg %p171
        $region34: #{tpu_custom_call.1} parent=11 // pred_check_branch
          %229 = sbr.rel (%p227) target = $region36
        $region35: #{tpu_custom_call.1} parent=11 // pred_region
          _
        $region36: #{tpu_custom_call.1} parent=11 // pred_fallthru
          _
      $region12: #{tpu_custom_call.1} parent=5 // pred_fallthru
        _
      %p230 = scmp.lt.s32.totalorder %s19, 2
      // Predicated region
      $region37: #{tpu_custom_call.1} parent=5 // pred_check
        %p231 = pneg %p230
      $region38: #{tpu_custom_call.1} parent=5 // pred_check_branch
        %233 = sbr.rel (%p231) target = $region40
      $region39: #{tpu_custom_call.1} parent=5 // pred_region
        // Predicated region
        $region41: #{tpu_custom_call.1} parent=39 // pred_check
          %p234 = pneg %p39
        $region42: #{tpu_custom_call.1} parent=39 // pred_check_branch
          %236 = sbr.rel (%p234) target = $region44
        $region43: #{tpu_custom_call.1} parent=39 // pred_region
          %s237 = sand.u32 %s29, 1
          %s238 = scalar_lea.sflag [#allocation4], %s237
          %s239 = sand.u32 %s29, 1
          %s240 = smul.addr %s239, 128
          %s241 = scalar_lea.vmem [#allocation3], %s240
          %s243 = ssub.s32 2048, 2048
          %244 = vsyncadd %s238, %s243
          %s245 = smul.addr %s19, 16
          %s246 = smul.addr %s245, 128
          %s247 = scalar_lea.hbm %s0, %s246
          %s248 = sshll.u32 %s241, 4
          %s249 = int_to_ptr.vmem [resolvable:$true] %s248
          %254 = dma.hbm_to_vmem [thread:$0]  %s247, 2048, %s249, %s238, 256, 256, 16
        $region44: #{tpu_custom_call.1} parent=39 // pred_fallthru
          _
      $region40: #{tpu_custom_call.1} parent=5 // pred_fallthru
        _
      %p255 = scmp.le.s32.totalorder 1, %s19
      %p256 = scmp.lt.s32.totalorder %s19, 3
      %p257 = pnand %p255, %p256
      %p258 = pneg %p257
      // Predicated region
      $region45: #{tpu_custom_call.1} parent=5 // pred_check
        _
      $region46: #{tpu_custom_call.1} parent=5 // pred_check_branch
        %260 = sbr.rel (%p257) target = $region48
      $region47: #{tpu_custom_call.1} parent=5 // pred_region
        %s261 = ssub.s32 %s19, 1
        %s262 = sand.u32 %s32, 1
        %s263 = scalar_lea.sflag [#allocation4], %s262
        %s264 = sand.u32 %s32, 1
        %s265 = smul.addr %s264, 128
        %s266 = scalar_lea.vmem [#allocation3], %s265
        // Predicated region
        $region49: #{tpu_custom_call.1} parent=47 // pred_check
          %p267 = pneg %p45
        $region50: #{tpu_custom_call.1} parent=47 // pred_check_branch
          %269 = sbr.rel (%p267) target = $region52
        $region51: #{tpu_custom_call.1} parent=47 // pred_region
          %270 = dma.done %s263, 2048
        $region52: #{tpu_custom_call.1} parent=47 // pred_fallthru
          _
        %s271 = sand.u32 %s32, 1
        %s272 = scalar_lea.sflag [#allocation4], %s271
        %s273 = sand.u32 %s32, 1
        %s274 = smul.addr %s273, 128
        %s275 = scalar_lea.vmem [#allocation3], %s274
        %p276 = pneg %p45
        %p277 = pneg %p42
        %p278 = pneg %p66
        %p279 = pneg %p63
        %p280 = pneg %p87
        %p281 = pneg %p84
        %p282 = pneg %p108
        %p283 = pneg %p105
        %p284 = pneg %p129
        %p285 = pneg %p126
        %p286 = pneg %p150
        %p287 = pneg %p147
        %p288 = pneg %p171
        %p289 = pneg %p168
        %p290 = pneg %p197
        %p291 = pneg %p194
        %s292 = sand.u32 %s184, 1
        %s293 = scalar_lea.sflag [#allocation5], %s292
        %s294 = sand.u32 %s184, 1
        %s295 = smul.addr %s294, 128
        %s296 = scalar_lea.vmem [#allocation6], %s295
        %v298 = vld [vmem:[%s266] sm:$0xff]
        %v299 = vld [vmem:[%s266 + $0x8] sm:$0xff]
        %v300 = vld [vmem:[%s266 + $0x10] sm:$0xff]
        %v301 = vld [vmem:[%s266 + $0x18] sm:$0xff]
        %v302 = vld [vmem:[%s266 + $0x20] sm:$0xff]
        %v303 = vld [vmem:[%s266 + $0x28] sm:$0xff]
        %v304 = vld [vmem:[%s266 + $0x30] sm:$0xff]
        %v305 = vld [vmem:[%s266 + $0x38] sm:$0xff]
        %v306 = vld [vmem:[%s266 + $0x40] sm:$0xff]
        %v307 = vld [vmem:[%s266 + $0x48] sm:$0xff]
        %v308 = vld [vmem:[%s266 + $0x50] sm:$0xff]
        %v309 = vld [vmem:[%s266 + $0x58] sm:$0xff]
        %v310 = vld [vmem:[%s266 + $0x60] sm:$0xff]
        %v311 = vld [vmem:[%s266 + $0x68] sm:$0xff]
        %v312 = vld [vmem:[%s266 + $0x70] sm:$0xff]
        %v313 = vld [vmem:[%s266 + $0x78] sm:$0xff]
        %314 = vxpose.xlu0.b32.start [1/16] %v298, 128
        %315 = vxpose.xlu0.b32.cont [2/16] %v300, 128
        %316 = vxpose.xlu0.b32.cont [3/16] %v302, 128
        %317 = vxpose.xlu0.b32.cont [4/16] %v304, 128
        %318 = vxpose.xlu0.b32.cont [5/16] %v306, 128
        %319 = vxpose.xlu0.b32.cont [6/16] %v308, 128
        %320 = vxpose.xlu0.b32.cont [7/16] %v310, 128
        %321 = vxpose.xlu0.b32.cont [8/16] %v312, 128
        %322 = vxpose.xlu0.b32.cont [9/16] 0.0, 128
        %323 = vxpose.xlu0.b32.cont [10/16] 0.0, 128
        %324 = vxpose.xlu0.b32.cont [11/16] 0.0, 128
        %325 = vxpose.xlu0.b32.cont [12/16] 0.0, 128
        %326 = vxpose.xlu0.b32.cont [13/16] 0.0, 128
        %327 = vxpose.xlu0.b32.cont [14/16] 0.0, 128
        %328 = vxpose.xlu0.b32.cont [15/16] 0.0, 128
        %329 = vxpose.xlu0.b32.end [16/16] 0.0, 128
        %v330 = vpop.trf.xlu0
        %v331 = vpop.trf.xlu0
        %v332 = vpop.trf.xlu0
        %v333 = vpop.trf.xlu0
        %v334 = vpop.trf.xlu0
        %v335 = vpop.trf.xlu0
        %v336 = vpop.trf.xlu0
        %v337 = vpop.trf.xlu0
        %v338 = vpop.trf.xlu0
        %v339 = vpop.trf.xlu0
        %v340 = vpop.trf.xlu0
        %v341 = vpop.trf.xlu0
        %v342 = vpop.trf.xlu0
        %v343 = vpop.trf.xlu0
        %v344 = vpop.trf.xlu0
        %v345 = vpop.trf.xlu0
        %346 = vxpose.xlu0.b32.start [1/16] %v299, 128
        %347 = vxpose.xlu0.b32.cont [2/16] %v301, 128
        %348 = vxpose.xlu0.b32.cont [3/16] %v303, 128
        %349 = vxpose.xlu0.b32.cont [4/16] %v305, 128
        %350 = vxpose.xlu0.b32.cont [5/16] %v307, 128
        %351 = vxpose.xlu0.b32.cont [6/16] %v309, 128
        %352 = vxpose.xlu0.b32.cont [7/16] %v311, 128
        %353 = vxpose.xlu0.b32.cont [8/16] %v313, 128
        %354 = vxpose.xlu0.b32.cont [9/16] 0.0, 128
        %355 = vxpose.xlu0.b32.cont [10/16] 0.0, 128
        %356 = vxpose.xlu0.b32.cont [11/16] 0.0, 128
        %357 = vxpose.xlu0.b32.cont [12/16] 0.0, 128
        %358 = vxpose.xlu0.b32.cont [13/16] 0.0, 128
        %359 = vxpose.xlu0.b32.cont [14/16] 0.0, 128
        %360 = vxpose.xlu0.b32.cont [15/16] 0.0, 128
        %361 = vxpose.xlu0.b32.end [16/16] 0.0, 128
        %v362 = vpop.trf.xlu0
        %v363 = vpop.trf.xlu0
        %v364 = vpop.trf.xlu0
        %v365 = vpop.trf.xlu0
        %v366 = vpop.trf.xlu0
        %v367 = vpop.trf.xlu0
        %v368 = vpop.trf.xlu0
        %v369 = vpop.trf.xlu0
        %v370 = vpop.trf.xlu0
        %v371 = vpop.trf.xlu0
        %v372 = vpop.trf.xlu0
        %v373 = vpop.trf.xlu0
        %v374 = vpop.trf.xlu0
        %v375 = vpop.trf.xlu0
        %v376 = vpop.trf.xlu0
        %v377 = vpop.trf.xlu0
        %v378 = vpack.c.bf16 %v331, %v330
        %v379 = vpack.c.bf16 %v333, %v332
        %v380 = vpack.c.bf16 %v335, %v334
        %v381 = vpack.c.bf16 %v337, %v336
        %v382 = vpack.c.bf16 %v339, %v338
        %v383 = vpack.c.bf16 %v341, %v340
        %v384 = vpack.c.bf16 %v343, %v342
        %v385 = vpack.c.bf16 %v345, %v344
        %v386 = vpack.c.bf16 %v363, %v362
        %v387 = vpack.c.bf16 %v365, %v364
        %v388 = vpack.c.bf16 %v367, %v366
        %v389 = vpack.c.bf16 %v369, %v368
        %v390 = vpack.c.bf16 %v371, %v370
        %v391 = vpack.c.bf16 %v373, %v372
        %v392 = vpack.c.bf16 %v375, %v374
        %v393 = vpack.c.bf16 %v377, %v376
        %v394 = vld [vmem:[%s1] sm:$0xf]
        %v395 = vld [vmem:[%s1 + $0x4] sm:$0xf]
        %v396 = vld [vmem:[%s1 + $0x8] sm:$0xf]
        %v397 = vld [vmem:[%s1 + $0xc] sm:$0xf]
        %v398 = vld [vmem:[%s1 + $0x10] sm:$0xf]
        %v399 = vld [vmem:[%s1 + $0x14] sm:$0xf]
        %v400 = vld [vmem:[%s1 + $0x18] sm:$0xf]
        %v401 = vld [vmem:[%s1 + $0x1c] sm:$0xf]
        %v402 = vld [vmem:[%s2] sm:$0x1]
        %v404 = vlaneseq
        %v405 = vshrl.u32 %v404, 7
        %v406 = vsub.s32 0, %v405
        %v407 = vrot.slane %v402, %v406
        %v417 = vunpack.c.l.b16 %v394
        %v418 = vunpack.c.l.b16 %v395
        %v419 = vunpack.c.l.b16 %v396
        %v420 = vunpack.c.l.b16 %v397
        %v421 = vunpack.c.l.b16 %v398
        %v422 = vunpack.c.l.b16 %v399
        %v423 = vunpack.c.l.b16 %v400
        %v424 = vunpack.c.l.b16 %v401
        %v425 = vpack.c.b16 %v418, %v417
        %v426 = vpack.c.b16 %v420, %v419
        %v427 = vpack.c.b16 %v422, %v421
        %v428 = vpack.c.b16 %v424, %v423
        %vm433 = vcmask 523264
        %v435 = vsel %vm433, %v378, 0
        %v438 = vsel %vm433, %v379, 0
        %v441 = vsel %vm433, %v380, 0
        %v444 = vsel %vm433, %v381, 0
        %v447 = vsel %vm433, %v382, 0
        %v450 = vsel %vm433, %v383, 0
        %v453 = vsel %vm433, %v384, 0
        %v456 = vsel %vm433, %v385, 0
        %v459 = vsel %vm433, %v386, 0
        %v462 = vsel %vm433, %v387, 0
        %v465 = vsel %vm433, %v388, 0
        %v468 = vsel %vm433, %v389, 0
        %v471 = vsel %vm433, %v390, 0
        %v474 = vsel %vm433, %v391, 0
        %v477 = vsel %vm433, %v392, 0
        %v480 = vsel %vm433, %v393, 0
        %482 = vmatprep.subr.bf16.mxu0 0
        %483 = vmatpush1.bf16.msra.mxu0 %v425
        %484 = vmatprep.subr.bf16.mxu0 0
        %485 = vmatpush1.bf16.msra.mxu0 %v426
        %486 = vmatprep.subr.bf16.mxu0 0
        %487 = vmatpush1.bf16.msra.mxu0 %v427
        %488 = vmatprep.subr.bf16.mxu0 0
        %489 = vmatpush1.bf16.msra.mxu0 %v428
        %490 = vmatprep.subr.bf16.mxu0 0
        %491 = vmatpush1.bf16.msra.mxu0 0
        %492 = vmatprep.subr.bf16.mxu0 0
        %493 = vmatpush1.bf16.msra.mxu0 0
        %494 = vmatprep.subr.bf16.mxu0 0
        %495 = vmatpush1.bf16.msra.mxu0 0
        %496 = vmatprep.subr.bf16.mxu0 0
        %497 = vmatpush1.bf16.msra.mxu0 0
        %498 = vmatprep.subr.bf16.mxu0 0
        %499 = vmatpush1.bf16.msra.mxu0 0
        %500 = vmatprep.subr.bf16.mxu0 0
        %501 = vmatpush1.bf16.msra.mxu0 0
        %502 = vmatprep.subr.bf16.mxu0 0
        %503 = vmatpush1.bf16.msra.mxu0 0
        %504 = vmatprep.subr.bf16.mxu0 0
        %505 = vmatpush1.bf16.msra.mxu0 0
        %506 = vmatprep.subr.bf16.mxu0 0
        %507 = vmatpush1.bf16.msra.mxu0 0
        %508 = vmatprep.subr.bf16.mxu0 0
        %509 = vmatpush1.bf16.msra.mxu0 0
        %510 = vmatprep.subr.bf16.mxu0 0
        %511 = vmatpush1.bf16.msra.mxu0 0
        %512 = vmatprep.subr.bf16.mxu0 0
        %513 = vmatpush1.bf16.msra.mxu0 0
        %514 = vmatprep.mubr.bf16.mxu0 0
        %515 = vmatmul.mubr.bf16.gmra.mrb[0].mxu0 %v435
        %v516 = vpop.f32.mrb[0].mxu0
        %v517 = vadd.f32 %v407, %v516
        %v518 = vpop.f32.mrb[0].mxu0
        %v519 = vpop.f32.mrb[0].mxu0
        %v520 = vadd.f32 %v407, %v519
        %v521 = vpop.f32.mrb[0].mxu0
        %522 = vmatprep.mubr.bf16.mxu0 0
        %523 = vmatmul.mubr.bf16.gmra.mrb[0].mxu0 %v438
        %v524 = vpop.f32.mrb[0].mxu0
        %v525 = vadd.f32 %v407, %v524
        %v526 = vpop.f32.mrb[0].mxu0
        %v527 = vpop.f32.mrb[0].mxu0
        %v528 = vadd.f32 %v407, %v527
        %v529 = vpop.f32.mrb[0].mxu0
        %530 = vmatprep.mubr.bf16.mxu0 0
        %531 = vmatmul.mubr.bf16.gmra.mrb[0].mxu0 %v441
        %v532 = vpop.f32.mrb[0].mxu0
        %v533 = vadd.f32 %v407, %v532
        %v534 = vpop.f32.mrb[0].mxu0
        %v535 = vpop.f32.mrb[0].mxu0
        %v536 = vadd.f32 %v407, %v535
        %v537 = vpop.f32.mrb[0].mxu0
        %538 = vmatprep.mubr.bf16.mxu0 0
        %539 = vmatmul.mubr.bf16.gmra.mrb[0].mxu0 %v444
        %v540 = vpop.f32.mrb[0].mxu0
        %v541 = vadd.f32 %v407, %v540
        %v542 = vpop.f32.mrb[0].mxu0
        %v543 = vpop.f32.mrb[0].mxu0
        %v544 = vadd.f32 %v407, %v543
        %v545 = vpop.f32.mrb[0].mxu0
        %546 = vmatprep.mubr.bf16.mxu0 0
        %547 = vmatmul.mubr.bf16.gmra.mrb[0].mxu0 %v447
        %v548 = vpop.f32.mrb[0].mxu0
        %v549 = vadd.f32 %v407, %v548
        %v550 = vpop.f32.mrb[0].mxu0
        %v551 = vpop.f32.mrb[0].mxu0
        %v552 = vadd.f32 %v407, %v551
        %v553 = vpop.f32.mrb[0].mxu0
        %554 = vmatprep.mubr.bf16.mxu0 0
        %555 = vmatmul.mubr.bf16.gmra.mrb[0].mxu0 %v450
        %v556 = vpop.f32.mrb[0].mxu0
        %v557 = vadd.f32 %v407, %v556
        %v558 = vpop.f32.mrb[0].mxu0
        %v559 = vpop.f32.mrb[0].mxu0
        %v560 = vadd.f32 %v407, %v559
        %v561 = vpop.f32.mrb[0].mxu0
        %562 = vmatprep.mubr.bf16.mxu0 0
        %563 = vmatmul.mubr.bf16.gmra.mrb[0].mxu0 %v453
        %v564 = vpop.f32.mrb[0].mxu0
        %v565 = vadd.f32 %v407, %v564
        %v566 = vpop.f32.mrb[0].mxu0
        %v567 = vpop.f32.mrb[0].mxu0
        %v568 = vadd.f32 %v407, %v567
        %v569 = vpop.f32.mrb[0].mxu0
        %570 = vmatprep.mubr.bf16.mxu0 0
        %571 = vmatmul.mubr.bf16.gmra.mrb[0].mxu0 %v456
        %v572 = vpop.f32.mrb[0].mxu0
        %v573 = vadd.f32 %v407, %v572
        %v574 = vpop.f32.mrb[0].mxu0
        %v575 = vpop.f32.mrb[0].mxu0
        %v576 = vadd.f32 %v407, %v575
        %v577 = vpop.f32.mrb[0].mxu0
        %578 = vmatprep.mubr.bf16.mxu0 0
        %579 = vmatmul.mubr.bf16.gmra.mrb[0].mxu0 %v459
        %v580 = vpop.f32.mrb[0].mxu0
        %v581 = vadd.f32 %v407, %v580
        %v582 = vpop.f32.mrb[0].mxu0
        %v583 = vpop.f32.mrb[0].mxu0
        %v584 = vadd.f32 %v407, %v583
        %v585 = vpop.f32.mrb[0].mxu0
        %586 = vmatprep.mubr.bf16.mxu0 0
        %587 = vmatmul.mubr.bf16.gmra.mrb[0].mxu0 %v462
        %v588 = vpop.f32.mrb[0].mxu0
        %v589 = vadd.f32 %v407, %v588
        %v590 = vpop.f32.mrb[0].mxu0
        %v591 = vpop.f32.mrb[0].mxu0
        %v592 = vadd.f32 %v407, %v591
        %v593 = vpop.f32.mrb[0].mxu0
        %594 = vmatprep.mubr.bf16.mxu0 0
        %595 = vmatmul.mubr.bf16.gmra.mrb[0].mxu0 %v465
        %v596 = vpop.f32.mrb[0].mxu0
        %v597 = vadd.f32 %v407, %v596
        %v598 = vpop.f32.mrb[0].mxu0
        %v599 = vpop.f32.mrb[0].mxu0
        %v600 = vadd.f32 %v407, %v599
        %v601 = vpop.f32.mrb[0].mxu0
        %602 = vmatprep.mubr.bf16.mxu0 0
        %603 = vmatmul.mubr.bf16.gmra.mrb[0].mxu0 %v468
        %v604 = vpop.f32.mrb[0].mxu0
        %v605 = vadd.f32 %v407, %v604
        %v606 = vpop.f32.mrb[0].mxu0
        %v607 = vpop.f32.mrb[0].mxu0
        %v608 = vadd.f32 %v407, %v607
        %v609 = vpop.f32.mrb[0].mxu0
        %610 = vmatprep.mubr.bf16.mxu0 0
        %611 = vmatmul.mubr.bf16.gmra.mrb[0].mxu0 %v471
        %v612 = vpop.f32.mrb[0].mxu0
        %v613 = vadd.f32 %v407, %v612
        %v614 = vpop.f32.mrb[0].mxu0
        %v615 = vpop.f32.mrb[0].mxu0
        %v616 = vadd.f32 %v407, %v615
        %v617 = vpop.f32.mrb[0].mxu0
        %618 = vmatprep.mubr.bf16.mxu0 0
        %619 = vmatmul.mubr.bf16.gmra.mrb[0].mxu0 %v474
        %v620 = vpop.f32.mrb[0].mxu0
        %v621 = vadd.f32 %v407, %v620
        %v622 = vpop.f32.mrb[0].mxu0
        %v623 = vpop.f32.mrb[0].mxu0
        %v624 = vadd.f32 %v407, %v623
        %v625 = vpop.f32.mrb[0].mxu0
        %626 = vmatprep.mubr.bf16.mxu0 0
        %627 = vmatmul.mubr.bf16.gmra.mrb[0].mxu0 %v477
        %v628 = vpop.f32.mrb[0].mxu0
        %v629 = vadd.f32 %v407, %v628
        %v630 = vpop.f32.mrb[0].mxu0
        %v631 = vpop.f32.mrb[0].mxu0
        %v632 = vadd.f32 %v407, %v631
        %v633 = vpop.f32.mrb[0].mxu0
        %634 = vmatprep.mubr.bf16.mxu0 0
        %635 = vmatmul.mubr.bf16.gmra.mrb[0].mxu0 %v480
        %v636 = vpop.f32.mrb[0].mxu0
        %v637 = vadd.f32 %v407, %v636
        %v638 = vpop.f32.mrb[0].mxu0
        %v639 = vpop.f32.mrb[0].mxu0
        %v640 = vadd.f32 %v407, %v639
        %v641 = vpop.f32.mrb[0].mxu0
        %642 = vdwg.mxu0
        %v643 = vmax.f32 %v517, 0.0
        %v644 = vmax.f32 %v520, 0.0
        %v645 = vmax.f32 %v525, 0.0
        %v646 = vmax.f32 %v528, 0.0
        %v647 = vmax.f32 %v533, 0.0
        %v648 = vmax.f32 %v536, 0.0
        %v649 = vmax.f32 %v541, 0.0
        %v650 = vmax.f32 %v544, 0.0
        %v651 = vmax.f32 %v549, 0.0
        %v652 = vmax.f32 %v552, 0.0
        %v653 = vmax.f32 %v557, 0.0
        %v654 = vmax.f32 %v560, 0.0
        %v655 = vmax.f32 %v565, 0.0
        %v656 = vmax.f32 %v568, 0.0
        %v657 = vmax.f32 %v573, 0.0
        %v658 = vmax.f32 %v576, 0.0
        %v659 = vmax.f32 %v581, 0.0
        %v660 = vmax.f32 %v584, 0.0
        %v661 = vmax.f32 %v589, 0.0
        %v662 = vmax.f32 %v592, 0.0
        %v663 = vmax.f32 %v597, 0.0
        %v664 = vmax.f32 %v600, 0.0
        %v665 = vmax.f32 %v605, 0.0
        %v666 = vmax.f32 %v608, 0.0
        %v667 = vmax.f32 %v613, 0.0
        %v668 = vmax.f32 %v616, 0.0
        %v669 = vmax.f32 %v621, 0.0
        %v670 = vmax.f32 %v624, 0.0
        %v671 = vmax.f32 %v629, 0.0
        %v672 = vmax.f32 %v632, 0.0
        %v673 = vmax.f32 %v637, 0.0
        %v674 = vmax.f32 %v640, 0.0
        %vm675 = vcmask 130048
        %676 = vst.msk [vmem:[#allocation2] sm:$0xff] %vm675, 0.0
        %677 = vst.msk [vmem:[#allocation2 + $0x8] sm:$0xff] %vm675, 0.0
        %vm678 = vcmask 123904
        %679 = vst.msk [vmem:[#allocation2 + $0x10] sm:$0x3] %vm678, 0.0
        %680 = vst.msk [vmem:[#allocation2 + $0x18] sm:$0xff] %vm675, 0.0
        %681 = vst.msk [vmem:[#allocation2 + $0x20] sm:$0xff] %vm675, 0.0
        %682 = vst.msk [vmem:[#allocation2 + $0x28] sm:$0x3] %vm678, 0.0
        %683 = vst.msk [vmem:[#allocation2 + $0x30] sm:$0xff] %vm675, 0.0
        %684 = vst.msk [vmem:[#allocation2 + $0x38] sm:$0xff] %vm675, 0.0
        %685 = vst.msk [vmem:[#allocation2 + $0x40] sm:$0x3] %vm678, 0.0
        %686 = vst.msk [vmem:[#allocation2 + $0x48] sm:$0xff] %vm675, 0.0
        %687 = vst.msk [vmem:[#allocation2 + $0x50] sm:$0xff] %vm675, 0.0
        %688 = vst.msk [vmem:[#allocation2 + $0x58] sm:$0x3] %vm678, 0.0
        %689 = vst.msk [vmem:[#allocation2 + $0x60] sm:$0xff] %vm675, 0.0
        %690 = vst.msk [vmem:[#allocation2 + $0x68] sm:$0xff] %vm675, 0.0
        %691 = vst.msk [vmem:[#allocation2 + $0x70] sm:$0x3] %vm678, 0.0
        %692 = vst.msk [vmem:[#allocation2 + $0x78] sm:$0xff] %vm675, 0.0
        %693 = vst.msk [vmem:[#allocation2 + $0x80] sm:$0xff] %vm675, 0.0
        %694 = vst.msk [vmem:[#allocation2 + $0x88] sm:$0x3] %vm678, 0.0
        %695 = vst.msk [vmem:[#allocation2 + $0x90] sm:$0xff] %vm675, 0.0
        %696 = vst.msk [vmem:[#allocation2 + $0x98] sm:$0xff] %vm675, 0.0
        %697 = vst.msk [vmem:[#allocation2 + $0xa0] sm:$0x3] %vm678, 0.0
        %698 = vst.msk [vmem:[#allocation2 + $0xa8] sm:$0xff] %vm675, 0.0
        %699 = vst.msk [vmem:[#allocation2 + $0xb0] sm:$0xff] %vm675, 0.0
        %700 = vst.msk [vmem:[#allocation2 + $0xb8] sm:$0x3] %vm678, 0.0
        %701 = vst.msk [vmem:[#allocation2 + $0xc0] sm:$0xff] %vm675, 0.0
        %702 = vst.msk [vmem:[#allocation2 + $0xc8] sm:$0xff] %vm675, 0.0
        %703 = vst.msk [vmem:[#allocation2 + $0xd0] sm:$0x3] %vm678, 0.0
        %704 = vst.msk [vmem:[#allocation2 + $0xd8] sm:$0xff] %vm675, 0.0
        %705 = vst.msk [vmem:[#allocation2 + $0xe0] sm:$0xff] %vm675, 0.0
        %706 = vst.msk [vmem:[#allocation2 + $0xe8] sm:$0x3] %vm678, 0.0
        %707 = vst.msk [vmem:[#allocation2 + $0xf0] sm:$0xff] %vm675, 0.0
        %708 = vst.msk [vmem:[#allocation2 + $0xf8] sm:$0xff] %vm675, 0.0
        %709 = vst.msk [vmem:[#allocation2 + $0x100] sm:$0x3] %vm678, 0.0
        %710 = vst.msk [vmem:[#allocation2 + $0x108] sm:$0xff] %vm675, 0.0
        %711 = vst.msk [vmem:[#allocation2 + $0x110] sm:$0xff] %vm675, 0.0
        %712 = vst.msk [vmem:[#allocation2 + $0x118] sm:$0x3] %vm678, 0.0
        %713 = vst.msk [vmem:[#allocation2 + $0x120] sm:$0xff] %vm675, 0.0
        %714 = vst.msk [vmem:[#allocation2 + $0x128] sm:$0xff] %vm675, 0.0
        %715 = vst.msk [vmem:[#allocation2 + $0x130] sm:$0x3] %vm678, 0.0
        %716 = vst.msk [vmem:[#allocation2 + $0x138] sm:$0xff] %vm675, 0.0
        %717 = vst.msk [vmem:[#allocation2 + $0x140] sm:$0xff] %vm675, 0.0
        %718 = vst.msk [vmem:[#allocation2 + $0x148] sm:$0x3] %vm678, 0.0
        %719 = vst.msk [vmem:[#allocation2 + $0x150] sm:$0xff] %vm675, 0.0
        %720 = vst.msk [vmem:[#allocation2 + $0x158] sm:$0xff] %vm675, 0.0
        %721 = vst.msk [vmem:[#allocation2 + $0x160] sm:$0x3] %vm678, 0.0
        %722 = vst.msk [vmem:[#allocation2 + $0x168] sm:$0xff] %vm675, 0.0
        %723 = vst.msk [vmem:[#allocation2 + $0x170] sm:$0xff] %vm675, 0.0
        %724 = vst.msk [vmem:[#allocation2 + $0x178] sm:$0x3] %vm678, 0.0
        %725 = vst.msk [vmem:[#allocation2 + $0x180] sm:$0xff] %vm675, 0.0
        %726 = vst.msk [vmem:[#allocation2 + $0x188] sm:$0xff] %vm675, 0.0
        %727 = vst.msk [vmem:[#allocation2 + $0x190] sm:$0x3] %vm678, 0.0
        %728 = vst.msk [vmem:[#allocation2 + $0x198] sm:$0xff] %vm675, 0.0
        %729 = vst.msk [vmem:[#allocation2 + $0x1a0] sm:$0xff] %vm675, 0.0
        %730 = vst.msk [vmem:[#allocation2 + $0x1a8] sm:$0x3] %vm678, 0.0
        %s731 = scalar_lea.vmem [#allocation2], 24
        %732 = vst.msk [vmem:[%s731 + $0x1] sm:$0xff] %vm675, %v643
        %733 = vst.msk [vmem:[%s731 + $0x9] sm:$0xff] %vm675, %v644
        %734 = vst.msk [vmem:[%s731 + $0x19] sm:$0xff] %vm675, %v645
        %735 = vst.msk [vmem:[%s731 + $0x21] sm:$0xff] %vm675, %v646
        %736 = vst.msk [vmem:[%s731 + $0x31] sm:$0xff] %vm675, %v647
        %737 = vst.msk [vmem:[%s731 + $0x39] sm:$0xff] %vm675, %v648
        %738 = vst.msk [vmem:[%s731 + $0x49] sm:$0xff] %vm675, %v649
        %739 = vst.msk [vmem:[%s731 + $0x51] sm:$0xff] %vm675, %v650
        %740 = vst.msk [vmem:[%s731 + $0x61] sm:$0xff] %vm675, %v651
        %741 = vst.msk [vmem:[%s731 + $0x69] sm:$0xff] %vm675, %v652
        %742 = vst.msk [vmem:[%s731 + $0x79] sm:$0xff] %vm675, %v653
        %743 = vst.msk [vmem:[%s731 + $0x81] sm:$0xff] %vm675, %v654
        %744 = vst.msk [vmem:[%s731 + $0x91] sm:$0xff] %vm675, %v655
        %745 = vst.msk [vmem:[%s731 + $0x99] sm:$0xff] %vm675, %v656
        %746 = vst.msk [vmem:[%s731 + $0xa9] sm:$0xff] %vm675, %v657
        %747 = vst.msk [vmem:[%s731 + $0xb1] sm:$0xff] %vm675, %v658
        %748 = vst.msk [vmem:[%s731 + $0xc1] sm:$0xff] %vm675, %v659
        %749 = vst.msk [vmem:[%s731 + $0xc9] sm:$0xff] %vm675, %v660
        %750 = vst.msk [vmem:[%s731 + $0xd9] sm:$0xff] %vm675, %v661
        %751 = vst.msk [vmem:[%s731 + $0xe1] sm:$0xff] %vm675, %v662
        %752 = vst.msk [vmem:[%s731 + $0xf1] sm:$0xff] %vm675, %v663
        %753 = vst.msk [vmem:[%s731 + $0xf9] sm:$0xff] %vm675, %v664
        %754 = vst.msk [vmem:[%s731 + $0x109] sm:$0xff] %vm675, %v665
        %755 = vst.msk [vmem:[%s731 + $0x111] sm:$0xff] %vm675, %v666
        %756 = vst.msk [vmem:[%s731 + $0x121] sm:$0xff] %vm675, %v667
        %757 = vst.msk [vmem:[%s731 + $0x129] sm:$0xff] %vm675, %v668
        %758 = vst.msk [vmem:[%s731 + $0x139] sm:$0xff] %vm675, %v669
        %759 = vst.msk [vmem:[%s731 + $0x141] sm:$0xff] %vm675, %v670
        %760 = vst.msk [vmem:[%s731 + $0x151] sm:$0xff] %vm675, %v671
        %761 = vst.msk [vmem:[%s731 + $0x159] sm:$0xff] %vm675, %v672
        %762 = vst.msk [vmem:[%s731 + $0x169] sm:$0xff] %vm675, %v673
        %763 = vst.msk [vmem:[%s731 + $0x171] sm:$0xff] %vm675, %v674
        %v764 = vld [vmem:[#allocation2] sm:$0xff]
        %v765 = vld [vmem:[#allocation2 + $0x8] sm:$0xff]
        %v766 = vld [vmem:[#allocation2 + $0x18] sm:$0xff]
        %v767 = vld [vmem:[#allocation2 + $0x20] sm:$0xff]
        %v768 = vld [vmem:[#allocation2 + $0x30] sm:$0xff]
        %v769 = vld [vmem:[#allocation2 + $0x38] sm:$0xff]
        %v770 = vld [vmem:[#allocation2 + $0x48] sm:$0xff]
        %v771 = vld [vmem:[#allocation2 + $0x50] sm:$0xff]
        %v772 = vld [vmem:[#allocation2 + $0x60] sm:$0xff]
        %v773 = vld [vmem:[#allocation2 + $0x68] sm:$0xff]
        %v774 = vld [vmem:[#allocation2 + $0x78] sm:$0xff]
        %v775 = vld [vmem:[#allocation2 + $0x80] sm:$0xff]
        %v776 = vld [vmem:[#allocation2 + $0x90] sm:$0xff]
        %v777 = vld [vmem:[#allocation2 + $0x98] sm:$0xff]
        %v778 = vld [vmem:[#allocation2 + $0xa8] sm:$0xff]
        %v779 = vld [vmem:[#allocation2 + $0xb0] sm:$0xff]
        %v780 = vld [vmem:[#allocation2 + $0xc0] sm:$0xff]
        %v781 = vld [vmem:[#allocation2 + $0xc8] sm:$0xff]
        %v782 = vld [vmem:[#allocation2 + $0xd8] sm:$0xff]
        %v783 = vld [vmem:[#allocation2 + $0xe0] sm:$0xff]
        %v784 = vld [vmem:[#allocation2 + $0xf0] sm:$0xff]
        %v785 = vld [vmem:[#allocation2 + $0xf8] sm:$0xff]
        %v786 = vld [vmem:[#allocation2 + $0x108] sm:$0xff]
        %v787 = vld [vmem:[#allocation2 + $0x110] sm:$0xff]
        %v788 = vld [vmem:[#allocation2 + $0x120] sm:$0xff]
        %v789 = vld [vmem:[#allocation2 + $0x128] sm:$0xff]
        %v790 = vld [vmem:[#allocation2 + $0x138] sm:$0xff]
        %v791 = vld [vmem:[#allocation2 + $0x140] sm:$0xff]
        %v792 = vld [vmem:[#allocation2 + $0x150] sm:$0xff]
        %v793 = vld [vmem:[#allocation2 + $0x158] sm:$0xff]
        %v794 = vld [vmem:[#allocation2 + $0x168] sm:$0xff]
        %v795 = vld [vmem:[#allocation2 + $0x170] sm:$0xff]
        %v796 = vld [vmem:[#allocation2 + $0x1] sm:$0xff]
        %v797 = vld [vmem:[#allocation2 + $0x9] sm:$0xff]
        %v798 = vld [vmem:[#allocation2 + $0x19] sm:$0xff]
        %v799 = vld [vmem:[#allocation2 + $0x21] sm:$0xff]
        %v800 = vld [vmem:[#allocation2 + $0x31] sm:$0xff]
        %v801 = vld [vmem:[#allocation2 + $0x39] sm:$0xff]
        %v802 = vld [vmem:[#allocation2 + $0x49] sm:$0xff]
        %v803 = vld [vmem:[#allocation2 + $0x51] sm:$0xff]
        %v804 = vld [vmem:[#allocation2 + $0x61] sm:$0xff]
        %v805 = vld [vmem:[#allocation2 + $0x69] sm:$0xff]
        %v806 = vld [vmem:[#allocation2 + $0x79] sm:$0xff]
        %v807 = vld [vmem:[#allocation2 + $0x81] sm:$0xff]
        %v808 = vld [vmem:[#allocation2 + $0x91] sm:$0xff]
        %v809 = vld [vmem:[#allocation2 + $0x99] sm:$0xff]
        %v810 = vld [vmem:[#allocation2 + $0xa9] sm:$0xff]
        %v811 = vld [vmem:[#allocation2 + $0xb1] sm:$0xff]
        %v812 = vld [vmem:[#allocation2 + $0xc1] sm:$0xff]
        %v813 = vld [vmem:[#allocation2 + $0xc9] sm:$0xff]
        %v814 = vld [vmem:[#allocation2 + $0xd9] sm:$0xff]
        %v815 = vld [vmem:[#allocation2 + $0xe1] sm:$0xff]
        %v816 = vld [vmem:[#allocation2 + $0xf1] sm:$0xff]
        %v817 = vld [vmem:[#allocation2 + $0xf9] sm:$0xff]
        %v818 = vld [vmem:[#allocation2 + $0x109] sm:$0xff]
        %v819 = vld [vmem:[#allocation2 + $0x111] sm:$0xff]
        %v820 = vld [vmem:[#allocation2 + $0x121] sm:$0xff]
        %v821 = vld [vmem:[#allocation2 + $0x129] sm:$0xff]
        %v822 = vld [vmem:[#allocation2 + $0x139] sm:$0xff]
        %v823 = vld [vmem:[#allocation2 + $0x141] sm:$0xff]
        %v824 = vld [vmem:[#allocation2 + $0x151] sm:$0xff]
        %v825 = vld [vmem:[#allocation2 + $0x159] sm:$0xff]
        %v826 = vld [vmem:[#allocation2 + $0x169] sm:$0xff]
        %v827 = vld [vmem:[#allocation2 + $0x171] sm:$0xff]
        %v828 = vld [vmem:[#allocation2 + $0x2] sm:$0xff]
        %v829 = vld [vmem:[#allocation2 + $0xa] sm:$0xff]
        %v830 = vld [vmem:[#allocation2 + $0x1a] sm:$0xff]
        %v831 = vld [vmem:[#allocation2 + $0x22] sm:$0xff]
        %v832 = vld [vmem:[#allocation2 + $0x32] sm:$0xff]
        %v833 = vld [vmem:[#allocation2 + $0x3a] sm:$0xff]
        %v834 = vld [vmem:[#allocation2 + $0x4a] sm:$0xff]
        %v835 = vld [vmem:[#allocation2 + $0x52] sm:$0xff]
        %v836 = vld [vmem:[#allocation2 + $0x62] sm:$0xff]
        %v837 = vld [vmem:[#allocation2 + $0x6a] sm:$0xff]
        %v838 = vld [vmem:[#allocation2 + $0x7a] sm:$0xff]
        %v839 = vld [vmem:[#allocation2 + $0x82] sm:$0xff]
        %v840 = vld [vmem:[#allocation2 + $0x92] sm:$0xff]
        %v841 = vld [vmem:[#allocation2 + $0x9a] sm:$0xff]
        %v842 = vld [vmem:[#allocation2 + $0xaa] sm:$0xff]
        %v843 = vld [vmem:[#allocation2 + $0xb2] sm:$0xff]
        %v844 = vld [vmem:[#allocation2 + $0xc2] sm:$0xff]
        %v845 = vld [vmem:[#allocation2 + $0xca] sm:$0xff]
        %v846 = vld [vmem:[#allocation2 + $0xda] sm:$0xff]
        %v847 = vld [vmem:[#allocation2 + $0xe2] sm:$0xff]
        %v848 = vld [vmem:[#allocation2 + $0xf2] sm:$0xff]
        %v849 = vld [vmem:[#allocation2 + $0xfa] sm:$0xff]
        %v850 = vld [vmem:[#allocation2 + $0x10a] sm:$0xff]
        %v851 = vld [vmem:[#allocation2 + $0x112] sm:$0xff]
        %v852 = vld [vmem:[#allocation2 + $0x122] sm:$0xff]
        %v853 = vld [vmem:[#allocation2 + $0x12a] sm:$0xff]
        %v854 = vld [vmem:[#allocation2 + $0x13a] sm:$0xff]
        %v855 = vld [vmem:[#allocation2 + $0x142] sm:$0xff]
        %v856 = vld [vmem:[#allocation2 + $0x152] sm:$0xff]
        %v857 = vld [vmem:[#allocation2 + $0x15a] sm:$0xff]
        %v858 = vld [vmem:[#allocation2 + $0x16a] sm:$0xff]
        %v859 = vld [vmem:[#allocation2 + $0x172] sm:$0xff]
        %v860 = vld [vmem:[%s731] sm:$0xff]
        %v861 = vld [vmem:[%s731 + $0x8] sm:$0xff]
        %v862 = vld [vmem:[%s731 + $0x18] sm:$0xff]
        %v863 = vld [vmem:[%s731 + $0x20] sm:$0xff]
        %v864 = vld [vmem:[%s731 + $0x30] sm:$0xff]
        %v865 = vld [vmem:[%s731 + $0x38] sm:$0xff]
        %v866 = vld [vmem:[%s731 + $0x48] sm:$0xff]
        %v867 = vld [vmem:[%s731 + $0x50] sm:$0xff]
        %v868 = vld [vmem:[%s731 + $0x60] sm:$0xff]
        %v869 = vld [vmem:[%s731 + $0x68] sm:$0xff]
        %v870 = vld [vmem:[%s731 + $0x78] sm:$0xff]
        %v871 = vld [vmem:[%s731 + $0x80] sm:$0xff]
        %v872 = vld [vmem:[%s731 + $0x90] sm:$0xff]
        %v873 = vld [vmem:[%s731 + $0x98] sm:$0xff]
        %v874 = vld [vmem:[%s731 + $0xa8] sm:$0xff]
        %v875 = vld [vmem:[%s731 + $0xb0] sm:$0xff]
        %v876 = vld [vmem:[%s731 + $0xc0] sm:$0xff]
        %v877 = vld [vmem:[%s731 + $0xc8] sm:$0xff]
        %v878 = vld [vmem:[%s731 + $0xd8] sm:$0xff]
        %v879 = vld [vmem:[%s731 + $0xe0] sm:$0xff]
        %v880 = vld [vmem:[%s731 + $0xf0] sm:$0xff]
        %v881 = vld [vmem:[%s731 + $0xf8] sm:$0xff]
        %v882 = vld [vmem:[%s731 + $0x108] sm:$0xff]
        %v883 = vld [vmem:[%s731 + $0x110] sm:$0xff]
        %v884 = vld [vmem:[%s731 + $0x120] sm:$0xff]
        %v885 = vld [vmem:[%s731 + $0x128] sm:$0xff]
        %v886 = vld [vmem:[%s731 + $0x138] sm:$0xff]
        %v887 = vld [vmem:[%s731 + $0x140] sm:$0xff]
        %v888 = vld [vmem:[%s731 + $0x150] sm:$0xff]
        %v889 = vld [vmem:[%s731 + $0x158] sm:$0xff]
        %v890 = vld [vmem:[%s731 + $0x168] sm:$0xff]
        %v891 = vld [vmem:[%s731 + $0x170] sm:$0xff]
        %v892 = vld [vmem:[%s731 + $0x1] sm:$0xff]
        %v893 = vld [vmem:[%s731 + $0x9] sm:$0xff]
        %v894 = vld [vmem:[%s731 + $0x19] sm:$0xff]
        %v895 = vld [vmem:[%s731 + $0x21] sm:$0xff]
        %v896 = vld [vmem:[%s731 + $0x31] sm:$0xff]
        %v897 = vld [vmem:[%s731 + $0x39] sm:$0xff]
        %v898 = vld [vmem:[%s731 + $0x49] sm:$0xff]
        %v899 = vld [vmem:[%s731 + $0x51] sm:$0xff]
        %v900 = vld [vmem:[%s731 + $0x61] sm:$0xff]
        %v901 = vld [vmem:[%s731 + $0x69] sm:$0xff]
        %v902 = vld [vmem:[%s731 + $0x79] sm:$0xff]
        %v903 = vld [vmem:[%s731 + $0x81] sm:$0xff]
        %v904 = vld [vmem:[%s731 + $0x91] sm:$0xff]
        %v905 = vld [vmem:[%s731 + $0x99] sm:$0xff]
        %v906 = vld [vmem:[%s731 + $0xa9] sm:$0xff]
        %v907 = vld [vmem:[%s731 + $0xb1] sm:$0xff]
        %v908 = vld [vmem:[%s731 + $0xc1] sm:$0xff]
        %v909 = vld [vmem:[%s731 + $0xc9] sm:$0xff]
        %v910 = vld [vmem:[%s731 + $0xd9] sm:$0xff]
        %v911 = vld [vmem:[%s731 + $0xe1] sm:$0xff]
        %v912 = vld [vmem:[%s731 + $0xf1] sm:$0xff]
        %v913 = vld [vmem:[%s731 + $0xf9] sm:$0xff]
        %v914 = vld [vmem:[%s731 + $0x109] sm:$0xff]
        %v915 = vld [vmem:[%s731 + $0x111] sm:$0xff]
        %v916 = vld [vmem:[%s731 + $0x121] sm:$0xff]
        %v917 = vld [vmem:[%s731 + $0x129] sm:$0xff]
        %v918 = vld [vmem:[%s731 + $0x139] sm:$0xff]
        %v919 = vld [vmem:[%s731 + $0x141] sm:$0xff]
        %v920 = vld [vmem:[%s731 + $0x151] sm:$0xff]
        %v921 = vld [vmem:[%s731 + $0x159] sm:$0xff]
        %v922 = vld [vmem:[%s731 + $0x169] sm:$0xff]
        %v923 = vld [vmem:[%s731 + $0x171] sm:$0xff]
        %v924 = vld [vmem:[%s731 + $0x2] sm:$0xff]
        %v925 = vld [vmem:[%s731 + $0xa] sm:$0xff]
        %v926 = vld [vmem:[%s731 + $0x1a] sm:$0xff]
        %v927 = vld [vmem:[%s731 + $0x22] sm:$0xff]
        %v928 = vld [vmem:[%s731 + $0x32] sm:$0xff]
        %v929 = vld [vmem:[%s731 + $0x3a] sm:$0xff]
        %v930 = vld [vmem:[%s731 + $0x4a] sm:$0xff]
        %v931 = vld [vmem:[%s731 + $0x52] sm:$0xff]
        %v932 = vld [vmem:[%s731 + $0x62] sm:$0xff]
        %v933 = vld [vmem:[%s731 + $0x6a] sm:$0xff]
        %v934 = vld [vmem:[%s731 + $0x7a] sm:$0xff]
        %v935 = vld [vmem:[%s731 + $0x82] sm:$0xff]
        %v936 = vld [vmem:[%s731 + $0x92] sm:$0xff]
        %v937 = vld [vmem:[%s731 + $0x9a] sm:$0xff]
        %v938 = vld [vmem:[%s731 + $0xaa] sm:$0xff]
        %v939 = vld [vmem:[%s731 + $0xb2] sm:$0xff]
        %v940 = vld [vmem:[%s731 + $0xc2] sm:$0xff]
        %v941 = vld [vmem:[%s731 + $0xca] sm:$0xff]
        %v942 = vld [vmem:[%s731 + $0xda] sm:$0xff]
        %v943 = vld [vmem:[%s731 + $0xe2] sm:$0xff]
        %v944 = vld [vmem:[%s731 + $0xf2] sm:$0xff]
        %v945 = vld [vmem:[%s731 + $0xfa] sm:$0xff]
        %v946 = vld [vmem:[%s731 + $0x10a] sm:$0xff]
        %v947 = vld [vmem:[%s731 + $0x112] sm:$0xff]
        %v948 = vld [vmem:[%s731 + $0x122] sm:$0xff]
        %v949 = vld [vmem:[%s731 + $0x12a] sm:$0xff]
        %v950 = vld [vmem:[%s731 + $0x13a] sm:$0xff]
        %v951 = vld [vmem:[%s731 + $0x142] sm:$0xff]
        %v952 = vld [vmem:[%s731 + $0x152] sm:$0xff]
        %v953 = vld [vmem:[%s731 + $0x15a] sm:$0xff]
        %v954 = vld [vmem:[%s731 + $0x16a] sm:$0xff]
        %v955 = vld [vmem:[%s731 + $0x172] sm:$0xff]
        %s956 = scalar_lea.vmem [#allocation2], 48
        %v957 = vld [vmem:[%s956] sm:$0xff]
        %v958 = vld [vmem:[%s956 + $0x8] sm:$0xff]
        %v959 = vld [vmem:[%s956 + $0x18] sm:$0xff]
        %v960 = vld [vmem:[%s956 + $0x20] sm:$0xff]
        %v961 = vld [vmem:[%s956 + $0x30] sm:$0xff]
        %v962 = vld [vmem:[%s956 + $0x38] sm:$0xff]
        %v963 = vld [vmem:[%s956 + $0x48] sm:$0xff]
        %v964 = vld [vmem:[%s956 + $0x50] sm:$0xff]
        %v965 = vld [vmem:[%s956 + $0x60] sm:$0xff]
        %v966 = vld [vmem:[%s956 + $0x68] sm:$0xff]
        %v967 = vld [vmem:[%s956 + $0x78] sm:$0xff]
        %v968 = vld [vmem:[%s956 + $0x80] sm:$0xff]
        %v969 = vld [vmem:[%s956 + $0x90] sm:$0xff]
        %v970 = vld [vmem:[%s956 + $0x98] sm:$0xff]
        %v971 = vld [vmem:[%s956 + $0xa8] sm:$0xff]
        %v972 = vld [vmem:[%s956 + $0xb0] sm:$0xff]
        %v973 = vld [vmem:[%s956 + $0xc0] sm:$0xff]
        %v974 = vld [vmem:[%s956 + $0xc8] sm:$0xff]
        %v975 = vld [vmem:[%s956 + $0xd8] sm:$0xff]
        %v976 = vld [vmem:[%s956 + $0xe0] sm:$0xff]
        %v977 = vld [vmem:[%s956 + $0xf0] sm:$0xff]
        %v978 = vld [vmem:[%s956 + $0xf8] sm:$0xff]
        %v979 = vld [vmem:[%s956 + $0x108] sm:$0xff]
        %v980 = vld [vmem:[%s956 + $0x110] sm:$0xff]
        %v981 = vld [vmem:[%s956 + $0x120] sm:$0xff]
        %v982 = vld [vmem:[%s956 + $0x128] sm:$0xff]
        %v983 = vld [vmem:[%s956 + $0x138] sm:$0xff]
        %v984 = vld [vmem:[%s956 + $0x140] sm:$0xff]
        %v985 = vld [vmem:[%s956 + $0x150] sm:$0xff]
        %v986 = vld [vmem:[%s956 + $0x158] sm:$0xff]
        %v987 = vld [vmem:[%s956 + $0x168] sm:$0xff]
        %v988 = vld [vmem:[%s956 + $0x170] sm:$0xff]
        %v989 = vld [vmem:[%s956 + $0x1] sm:$0xff]
        %v990 = vld [vmem:[%s956 + $0x9] sm:$0xff]
        %v991 = vld [vmem:[%s956 + $0x19] sm:$0xff]
        %v992 = vld [vmem:[%s956 + $0x21] sm:$0xff]
        %v993 = vld [vmem:[%s956 + $0x31] sm:$0xff]
        %v994 = vld [vmem:[%s956 + $0x39] sm:$0xff]
        %v995 = vld [vmem:[%s956 + $0x49] sm:$0xff]
        %v996 = vld [vmem:[%s956 + $0x51] sm:$0xff]
        %v997 = vld [vmem:[%s956 + $0x61] sm:$0xff]
        %v998 = vld [vmem:[%s956 + $0x69] sm:$0xff]
        %v999 = vld [vmem:[%s956 + $0x79] sm:$0xff]
        %v1000 = vld [vmem:[%s956 + $0x81] sm:$0xff]
        %v1001 = vld [vmem:[%s956 + $0x91] sm:$0xff]
        %v1002 = vld [vmem:[%s956 + $0x99] sm:$0xff]
        %v1003 = vld [vmem:[%s956 + $0xa9] sm:$0xff]
        %v1004 = vld [vmem:[%s956 + $0xb1] sm:$0xff]
        %v1005 = vld [vmem:[%s956 + $0xc1] sm:$0xff]
        %v1006 = vld [vmem:[%s956 + $0xc9] sm:$0xff]
        %v1007 = vld [vmem:[%s956 + $0xd9] sm:$0xff]
        %v1008 = vld [vmem:[%s956 + $0xe1] sm:$0xff]
        %v1009 = vld [vmem:[%s956 + $0xf1] sm:$0xff]
        %v1010 = vld [vmem:[%s956 + $0xf9] sm:$0xff]
        %v1011 = vld [vmem:[%s956 + $0x109] sm:$0xff]
        %v1012 = vld [vmem:[%s956 + $0x111] sm:$0xff]
        %v1013 = vld [vmem:[%s956 + $0x121] sm:$0xff]
        %v1014 = vld [vmem:[%s956 + $0x129] sm:$0xff]
        %v1015 = vld [vmem:[%s956 + $0x139] sm:$0xff]
        %v1016 = vld [vmem:[%s956 + $0x141] sm:$0xff]
        %v1017 = vld [vmem:[%s956 + $0x151] sm:$0xff]
        %v1018 = vld [vmem:[%s956 + $0x159] sm:$0xff]
        %v1019 = vld [vmem:[%s956 + $0x169] sm:$0xff]
        %v1020 = vld [vmem:[%s956 + $0x171] sm:$0xff]
        %v1021 = vld [vmem:[%s956 + $0x2] sm:$0xff]
        %v1022 = vld [vmem:[%s956 + $0xa] sm:$0xff]
        %v1023 = vld [vmem:[%s956 + $0x1a] sm:$0xff]
        %v1024 = vld [vmem:[%s956 + $0x22] sm:$0xff]
        %v1025 = vld [vmem:[%s956 + $0x32] sm:$0xff]
        %v1026 = vld [vmem:[%s956 + $0x3a] sm:$0xff]
        %v1027 = vld [vmem:[%s956 + $0x4a] sm:$0xff]
        %v1028 = vld [vmem:[%s956 + $0x52] sm:$0xff]
        %v1029 = vld [vmem:[%s956 + $0x62] sm:$0xff]
        %v1030 = vld [vmem:[%s956 + $0x6a] sm:$0xff]
        %v1031 = vld [vmem:[%s956 + $0x7a] sm:$0xff]
        %v1032 = vld [vmem:[%s956 + $0x82] sm:$0xff]
        %v1033 = vld [vmem:[%s956 + $0x92] sm:$0xff]
        %v1034 = vld [vmem:[%s956 + $0x9a] sm:$0xff]
        %v1035 = vld [vmem:[%s956 + $0xaa] sm:$0xff]
        %v1036 = vld [vmem:[%s956 + $0xb2] sm:$0xff]
        %v1037 = vld [vmem:[%s956 + $0xc2] sm:$0xff]
        %v1038 = vld [vmem:[%s956 + $0xca] sm:$0xff]
        %v1039 = vld [vmem:[%s956 + $0xda] sm:$0xff]
        %v1040 = vld [vmem:[%s956 + $0xe2] sm:$0xff]
        %v1041 = vld [vmem:[%s956 + $0xf2] sm:$0xff]
        %v1042 = vld [vmem:[%s956 + $0xfa] sm:$0xff]
        %v1043 = vld [vmem:[%s956 + $0x10a] sm:$0xff]
        %v1044 = vld [vmem:[%s956 + $0x112] sm:$0xff]
        %v1045 = vld [vmem:[%s956 + $0x122] sm:$0xff]
        %v1046 = vld [vmem:[%s956 + $0x12a] sm:$0xff]
        %v1047 = vld [vmem:[%s956 + $0x13a] sm:$0xff]
        %v1048 = vld [vmem:[%s956 + $0x142] sm:$0xff]
        %v1049 = vld [vmem:[%s956 + $0x152] sm:$0xff]
        %v1050 = vld [vmem:[%s956 + $0x15a] sm:$0xff]
        %v1051 = vld [vmem:[%s956 + $0x16a] sm:$0xff]
        %v1052 = vld [vmem:[%s956 + $0x172] sm:$0xff]
        %1085 = vrot.lane.b32.xlu0 %v796, 16
        %v1086 = vpop.permute.xlu0 %1085
        %1087 = vrot.lane.b32.xlu0 %v797, 16
        %v1088 = vpop.permute.xlu0 %1087
        %1089 = vrot.lane.b32.xlu0 %v798, 16
        %v1090 = vpop.permute.xlu0 %1089
        %1091 = vrot.lane.b32.xlu0 %v799, 16
        %v1092 = vpop.permute.xlu0 %1091
        %1093 = vrot.lane.b32.xlu0 %v800, 16
        %v1094 = vpop.permute.xlu0 %1093
        %1095 = vrot.lane.b32.xlu0 %v801, 16
        %v1096 = vpop.permute.xlu0 %1095
        %1097 = vrot.lane.b32.xlu0 %v802, 16
        %v1098 = vpop.permute.xlu0 %1097
        %1099 = vrot.lane.b32.xlu0 %v803, 16
        %v1100 = vpop.permute.xlu0 %1099
        %1101 = vrot.lane.b32.xlu0 %v804, 16
        %v1102 = vpop.permute.xlu0 %1101
        %1103 = vrot.lane.b32.xlu0 %v805, 16
        %v1104 = vpop.permute.xlu0 %1103
        %1105 = vrot.lane.b32.xlu0 %v806, 16
        %v1106 = vpop.permute.xlu0 %1105
        %1107 = vrot.lane.b32.xlu0 %v807, 16
        %v1108 = vpop.permute.xlu0 %1107
        %1109 = vrot.lane.b32.xlu0 %v808, 16
        %v1110 = vpop.permute.xlu0 %1109
        %1111 = vrot.lane.b32.xlu0 %v809, 16
        %v1112 = vpop.permute.xlu0 %1111
        %1113 = vrot.lane.b32.xlu0 %v810, 16
        %v1114 = vpop.permute.xlu0 %1113
        %1115 = vrot.lane.b32.xlu0 %v811, 16
        %v1116 = vpop.permute.xlu0 %1115
        %1117 = vrot.lane.b32.xlu0 %v812, 16
        %v1118 = vpop.permute.xlu0 %1117
        %1119 = vrot.lane.b32.xlu0 %v813, 16
        %v1120 = vpop.permute.xlu0 %1119
        %1121 = vrot.lane.b32.xlu0 %v814, 16
        %v1122 = vpop.permute.xlu0 %1121
        %1123 = vrot.lane.b32.xlu0 %v815, 16
        %v1124 = vpop.permute.xlu0 %1123
        %1125 = vrot.lane.b32.xlu0 %v816, 16
        %v1126 = vpop.permute.xlu0 %1125
        %1127 = vrot.lane.b32.xlu0 %v817, 16
        %v1128 = vpop.permute.xlu0 %1127
        %1129 = vrot.lane.b32.xlu0 %v818, 16
        %v1130 = vpop.permute.xlu0 %1129
        %1131 = vrot.lane.b32.xlu0 %v819, 16
        %v1132 = vpop.permute.xlu0 %1131
        %1133 = vrot.lane.b32.xlu0 %v820, 16
        %v1134 = vpop.permute.xlu0 %1133
        %1135 = vrot.lane.b32.xlu0 %v821, 16
        %v1136 = vpop.permute.xlu0 %1135
        %1137 = vrot.lane.b32.xlu0 %v822, 16
        %v1138 = vpop.permute.xlu0 %1137
        %1139 = vrot.lane.b32.xlu0 %v823, 16
        %v1140 = vpop.permute.xlu0 %1139
        %1141 = vrot.lane.b32.xlu0 %v824, 16
        %v1142 = vpop.permute.xlu0 %1141
        %1143 = vrot.lane.b32.xlu0 %v825, 16
        %v1144 = vpop.permute.xlu0 %1143
        %1145 = vrot.lane.b32.xlu0 %v826, 16
        %v1146 = vpop.permute.xlu0 %1145
        %1147 = vrot.lane.b32.xlu0 %v827, 16
        %v1148 = vpop.permute.xlu0 %1147
        %1213 = vrot.lane.b32.xlu0 %v828, 32
        %v1214 = vpop.permute.xlu0 %1213
        %1215 = vrot.lane.b32.xlu0 %v829, 32
        %v1216 = vpop.permute.xlu0 %1215
        %1217 = vrot.lane.b32.xlu0 %v830, 32
        %v1218 = vpop.permute.xlu0 %1217
        %1219 = vrot.lane.b32.xlu0 %v831, 32
        %v1220 = vpop.permute.xlu0 %1219
        %1221 = vrot.lane.b32.xlu0 %v832, 32
        %v1222 = vpop.permute.xlu0 %1221
        %1223 = vrot.lane.b32.xlu0 %v833, 32
        %v1224 = vpop.permute.xlu0 %1223
        %1225 = vrot.lane.b32.xlu0 %v834, 32
        %v1226 = vpop.permute.xlu0 %1225
        %1227 = vrot.lane.b32.xlu0 %v835, 32
        %v1228 = vpop.permute.xlu0 %1227
        %1229 = vrot.lane.b32.xlu0 %v836, 32
        %v1230 = vpop.permute.xlu0 %1229
        %1231 = vrot.lane.b32.xlu0 %v837, 32
        %v1232 = vpop.permute.xlu0 %1231
        %1233 = vrot.lane.b32.xlu0 %v838, 32
        %v1234 = vpop.permute.xlu0 %1233
        %1235 = vrot.lane.b32.xlu0 %v839, 32
        %v1236 = vpop.permute.xlu0 %1235
        %1237 = vrot.lane.b32.xlu0 %v840, 32
        %v1238 = vpop.permute.xlu0 %1237
        %1239 = vrot.lane.b32.xlu0 %v841, 32
        %v1240 = vpop.permute.xlu0 %1239
        %1241 = vrot.lane.b32.xlu0 %v842, 32
        %v1242 = vpop.permute.xlu0 %1241
        %1243 = vrot.lane.b32.xlu0 %v843, 32
        %v1244 = vpop.permute.xlu0 %1243
        %1245 = vrot.lane.b32.xlu0 %v844, 32
        %v1246 = vpop.permute.xlu0 %1245
        %1247 = vrot.lane.b32.xlu0 %v845, 32
        %v1248 = vpop.permute.xlu0 %1247
        %1249 = vrot.lane.b32.xlu0 %v846, 32
        %v1250 = vpop.permute.xlu0 %1249
        %1251 = vrot.lane.b32.xlu0 %v847, 32
        %v1252 = vpop.permute.xlu0 %1251
        %1253 = vrot.lane.b32.xlu0 %v848, 32
        %v1254 = vpop.permute.xlu0 %1253
        %1255 = vrot.lane.b32.xlu0 %v849, 32
        %v1256 = vpop.permute.xlu0 %1255
        %1257 = vrot.lane.b32.xlu0 %v850, 32
        %v1258 = vpop.permute.xlu0 %1257
        %1259 = vrot.lane.b32.xlu0 %v851, 32
        %v1260 = vpop.permute.xlu0 %1259
        %1261 = vrot.lane.b32.xlu0 %v852, 32
        %v1262 = vpop.permute.xlu0 %1261
        %1263 = vrot.lane.b32.xlu0 %v853, 32
        %v1264 = vpop.permute.xlu0 %1263
        %1265 = vrot.lane.b32.xlu0 %v854, 32
        %v1266 = vpop.permute.xlu0 %1265
        %1267 = vrot.lane.b32.xlu0 %v855, 32
        %v1268 = vpop.permute.xlu0 %1267
        %1269 = vrot.lane.b32.xlu0 %v856, 32
        %v1270 = vpop.permute.xlu0 %1269
        %1271 = vrot.lane.b32.xlu0 %v857, 32
        %v1272 = vpop.permute.xlu0 %1271
        %1273 = vrot.lane.b32.xlu0 %v858, 32
        %v1274 = vpop.permute.xlu0 %1273
        %1275 = vrot.lane.b32.xlu0 %v859, 32
        %v1276 = vpop.permute.xlu0 %1275
        %1341 = vrot.lane.b32.xlu0 %v860, 48
        %v1342 = vpop.permute.xlu0 %1341
        %1343 = vrot.lane.b32.xlu0 %v861, 48
        %v1344 = vpop.permute.xlu0 %1343
        %1345 = vrot.lane.b32.xlu0 %v862, 48
        %v1346 = vpop.permute.xlu0 %1345
        %1347 = vrot.lane.b32.xlu0 %v863, 48
        %v1348 = vpop.permute.xlu0 %1347
        %1349 = vrot.lane.b32.xlu0 %v864, 48
        %v1350 = vpop.permute.xlu0 %1349
        %1351 = vrot.lane.b32.xlu0 %v865, 48
        %v1352 = vpop.permute.xlu0 %1351
        %1353 = vrot.lane.b32.xlu0 %v866, 48
        %v1354 = vpop.permute.xlu0 %1353
        %1355 = vrot.lane.b32.xlu0 %v867, 48
        %v1356 = vpop.permute.xlu0 %1355
        %1357 = vrot.lane.b32.xlu0 %v868, 48
        %v1358 = vpop.permute.xlu0 %1357
        %1359 = vrot.lane.b32.xlu0 %v869, 48
        %v1360 = vpop.permute.xlu0 %1359
        %1361 = vrot.lane.b32.xlu0 %v870, 48
        %v1362 = vpop.permute.xlu0 %1361
        %1363 = vrot.lane.b32.xlu0 %v871, 48
        %v1364 = vpop.permute.xlu0 %1363
        %1365 = vrot.lane.b32.xlu0 %v872, 48
        %v1366 = vpop.permute.xlu0 %1365
        %1367 = vrot.lane.b32.xlu0 %v873, 48
        %v1368 = vpop.permute.xlu0 %1367
        %1369 = vrot.lane.b32.xlu0 %v874, 48
        %v1370 = vpop.permute.xlu0 %1369
        %1371 = vrot.lane.b32.xlu0 %v875, 48
        %v1372 = vpop.permute.xlu0 %1371
        %1373 = vrot.lane.b32.xlu0 %v876, 48
        %v1374 = vpop.permute.xlu0 %1373
        %1375 = vrot.lane.b32.xlu0 %v877, 48
        %v1376 = vpop.permute.xlu0 %1375
        %1377 = vrot.lane.b32.xlu0 %v878, 48
        %v1378 = vpop.permute.xlu0 %1377
        %1379 = vrot.lane.b32.xlu0 %v879, 48
        %v1380 = vpop.permute.xlu0 %1379
        %1381 = vrot.lane.b32.xlu0 %v880, 48
        %v1382 = vpop.permute.xlu0 %1381
        %1383 = vrot.lane.b32.xlu0 %v881, 48
        %v1384 = vpop.permute.xlu0 %1383
        %1385 = vrot.lane.b32.xlu0 %v882, 48
        %v1386 = vpop.permute.xlu0 %1385
        %1387 = vrot.lane.b32.xlu0 %v883, 48
        %v1388 = vpop.permute.xlu0 %1387
        %1389 = vrot.lane.b32.xlu0 %v884, 48
        %v1390 = vpop.permute.xlu0 %1389
        %1391 = vrot.lane.b32.xlu0 %v885, 48
        %v1392 = vpop.permute.xlu0 %1391
        %1393 = vrot.lane.b32.xlu0 %v886, 48
        %v1394 = vpop.permute.xlu0 %1393
        %1395 = vrot.lane.b32.xlu0 %v887, 48
        %v1396 = vpop.permute.xlu0 %1395
        %1397 = vrot.lane.b32.xlu0 %v888, 48
        %v1398 = vpop.permute.xlu0 %1397
        %1399 = vrot.lane.b32.xlu0 %v889, 48
        %v1400 = vpop.permute.xlu0 %1399
        %1401 = vrot.lane.b32.xlu0 %v890, 48
        %v1402 = vpop.permute.xlu0 %1401
        %1403 = vrot.lane.b32.xlu0 %v891, 48
        %v1404 = vpop.permute.xlu0 %1403
        %1469 = vrot.lane.b32.xlu0 %v892, 64
        %v1470 = vpop.permute.xlu0 %1469
        %1471 = vrot.lane.b32.xlu0 %v893, 64
        %v1472 = vpop.permute.xlu0 %1471
        %1473 = vrot.lane.b32.xlu0 %v894, 64
        %v1474 = vpop.permute.xlu0 %1473
        %1475 = vrot.lane.b32.xlu0 %v895, 64
        %v1476 = vpop.permute.xlu0 %1475
        %1477 = vrot.lane.b32.xlu0 %v896, 64
        %v1478 = vpop.permute.xlu0 %1477
        %1479 = vrot.lane.b32.xlu0 %v897, 64
        %v1480 = vpop.permute.xlu0 %1479
        %1481 = vrot.lane.b32.xlu0 %v898, 64
        %v1482 = vpop.permute.xlu0 %1481
        %1483 = vrot.lane.b32.xlu0 %v899, 64
        %v1484 = vpop.permute.xlu0 %1483
        %1485 = vrot.lane.b32.xlu0 %v900, 64
        %v1486 = vpop.permute.xlu0 %1485
        %1487 = vrot.lane.b32.xlu0 %v901, 64
        %v1488 = vpop.permute.xlu0 %1487
        %1489 = vrot.lane.b32.xlu0 %v902, 64
        %v1490 = vpop.permute.xlu0 %1489
        %1491 = vrot.lane.b32.xlu0 %v903, 64
        %v1492 = vpop.permute.xlu0 %1491
        %1493 = vrot.lane.b32.xlu0 %v904, 64
        %v1494 = vpop.permute.xlu0 %1493
        %1495 = vrot.lane.b32.xlu0 %v905, 64
        %v1496 = vpop.permute.xlu0 %1495
        %1497 = vrot.lane.b32.xlu0 %v906, 64
        %v1498 = vpop.permute.xlu0 %1497
        %1499 = vrot.lane.b32.xlu0 %v907, 64
        %v1500 = vpop.permute.xlu0 %1499
        %1501 = vrot.lane.b32.xlu0 %v908, 64
        %v1502 = vpop.permute.xlu0 %1501
        %1503 = vrot.lane.b32.xlu0 %v909, 64
        %v1504 = vpop.permute.xlu0 %1503
        %1505 = vrot.lane.b32.xlu0 %v910, 64
        %v1506 = vpop.permute.xlu0 %1505
        %1507 = vrot.lane.b32.xlu0 %v911, 64
        %v1508 = vpop.permute.xlu0 %1507
        %1509 = vrot.lane.b32.xlu0 %v912, 64
        %v1510 = vpop.permute.xlu0 %1509
        %1511 = vrot.lane.b32.xlu0 %v913, 64
        %v1512 = vpop.permute.xlu0 %1511
        %1513 = vrot.lane.b32.xlu0 %v914, 64
        %v1514 = vpop.permute.xlu0 %1513
        %1515 = vrot.lane.b32.xlu0 %v915, 64
        %v1516 = vpop.permute.xlu0 %1515
        %1517 = vrot.lane.b32.xlu0 %v916, 64
        %v1518 = vpop.permute.xlu0 %1517
        %1519 = vrot.lane.b32.xlu0 %v917, 64
        %v1520 = vpop.permute.xlu0 %1519
        %1521 = vrot.lane.b32.xlu0 %v918, 64
        %v1522 = vpop.permute.xlu0 %1521
        %1523 = vrot.lane.b32.xlu0 %v919, 64
        %v1524 = vpop.permute.xlu0 %1523
        %1525 = vrot.lane.b32.xlu0 %v920, 64
        %v1526 = vpop.permute.xlu0 %1525
        %1527 = vrot.lane.b32.xlu0 %v921, 64
        %v1528 = vpop.permute.xlu0 %1527
        %1529 = vrot.lane.b32.xlu0 %v922, 64
        %v1530 = vpop.permute.xlu0 %1529
        %1531 = vrot.lane.b32.xlu0 %v923, 64
        %v1532 = vpop.permute.xlu0 %1531
        %1597 = vrot.lane.b32.xlu0 %v924, 80
        %v1598 = vpop.permute.xlu0 %1597
        %1599 = vrot.lane.b32.xlu0 %v925, 80
        %v1600 = vpop.permute.xlu0 %1599
        %1601 = vrot.lane.b32.xlu0 %v926, 80
        %v1602 = vpop.permute.xlu0 %1601
        %1603 = vrot.lane.b32.xlu0 %v927, 80
        %v1604 = vpop.permute.xlu0 %1603
        %1605 = vrot.lane.b32.xlu0 %v928, 80
        %v1606 = vpop.permute.xlu0 %1605
        %1607 = vrot.lane.b32.xlu0 %v929, 80
        %v1608 = vpop.permute.xlu0 %1607
        %1609 = vrot.lane.b32.xlu0 %v930, 80
        %v1610 = vpop.permute.xlu0 %1609
        %1611 = vrot.lane.b32.xlu0 %v931, 80
        %v1612 = vpop.permute.xlu0 %1611
        %1613 = vrot.lane.b32.xlu0 %v932, 80
        %v1614 = vpop.permute.xlu0 %1613
        %1615 = vrot.lane.b32.xlu0 %v933, 80
        %v1616 = vpop.permute.xlu0 %1615
        %1617 = vrot.lane.b32.xlu0 %v934, 80
        %v1618 = vpop.permute.xlu0 %1617
        %1619 = vrot.lane.b32.xlu0 %v935, 80
        %v1620 = vpop.permute.xlu0 %1619
        %1621 = vrot.lane.b32.xlu0 %v936, 80
        %v1622 = vpop.permute.xlu0 %1621
        %1623 = vrot.lane.b32.xlu0 %v937, 80
        %v1624 = vpop.permute.xlu0 %1623
        %1625 = vrot.lane.b32.xlu0 %v938, 80
        %v1626 = vpop.permute.xlu0 %1625
        %1627 = vrot.lane.b32.xlu0 %v939, 80
        %v1628 = vpop.permute.xlu0 %1627
        %1629 = vrot.lane.b32.xlu0 %v940, 80
        %v1630 = vpop.permute.xlu0 %1629
        %1631 = vrot.lane.b32.xlu0 %v941, 80
        %v1632 = vpop.permute.xlu0 %1631
        %1633 = vrot.lane.b32.xlu0 %v942, 80
        %v1634 = vpop.permute.xlu0 %1633
        %1635 = vrot.lane.b32.xlu0 %v943, 80
        %v1636 = vpop.permute.xlu0 %1635
        %1637 = vrot.lane.b32.xlu0 %v944, 80
        %v1638 = vpop.permute.xlu0 %1637
        %1639 = vrot.lane.b32.xlu0 %v945, 80
        %v1640 = vpop.permute.xlu0 %1639
        %1641 = vrot.lane.b32.xlu0 %v946, 80
        %v1642 = vpop.permute.xlu0 %1641
        %1643 = vrot.lane.b32.xlu0 %v947, 80
        %v1644 = vpop.permute.xlu0 %1643
        %1645 = vrot.lane.b32.xlu0 %v948, 80
        %v1646 = vpop.permute.xlu0 %1645
        %1647 = vrot.lane.b32.xlu0 %v949, 80
        %v1648 = vpop.permute.xlu0 %1647
        %1649 = vrot.lane.b32.xlu0 %v950, 80
        %v1650 = vpop.permute.xlu0 %1649
        %1651 = vrot.lane.b32.xlu0 %v951, 80
        %v1652 = vpop.permute.xlu0 %1651
        %1653 = vrot.lane.b32.xlu0 %v952, 80
        %v1654 = vpop.permute.xlu0 %1653
        %1655 = vrot.lane.b32.xlu0 %v953, 80
        %v1656 = vpop.permute.xlu0 %1655
        %1657 = vrot.lane.b32.xlu0 %v954, 80
        %v1658 = vpop.permute.xlu0 %1657
        %1659 = vrot.lane.b32.xlu0 %v955, 80
        %v1660 = vpop.permute.xlu0 %1659
        %1725 = vrot.lane.b32.xlu0 %v957, 96
        %v1726 = vpop.permute.xlu0 %1725
        %1727 = vrot.lane.b32.xlu0 %v958, 96
        %v1728 = vpop.permute.xlu0 %1727
        %1729 = vrot.lane.b32.xlu0 %v959, 96
        %v1730 = vpop.permute.xlu0 %1729
        %1731 = vrot.lane.b32.xlu0 %v960, 96
        %v1732 = vpop.permute.xlu0 %1731
        %1733 = vrot.lane.b32.xlu0 %v961, 96
        %v1734 = vpop.permute.xlu0 %1733
        %1735 = vrot.lane.b32.xlu0 %v962, 96
        %v1736 = vpop.permute.xlu0 %1735
        %1737 = vrot.lane.b32.xlu0 %v963, 96
        %v1738 = vpop.permute.xlu0 %1737
        %1739 = vrot.lane.b32.xlu0 %v964, 96
        %v1740 = vpop.permute.xlu0 %1739
        %1741 = vrot.lane.b32.xlu0 %v965, 96
        %v1742 = vpop.permute.xlu0 %1741
        %1743 = vrot.lane.b32.xlu0 %v966, 96
        %v1744 = vpop.permute.xlu0 %1743
        %1745 = vrot.lane.b32.xlu0 %v967, 96
        %v1746 = vpop.permute.xlu0 %1745
        %1747 = vrot.lane.b32.xlu0 %v968, 96
        %v1748 = vpop.permute.xlu0 %1747
        %1749 = vrot.lane.b32.xlu0 %v969, 96
        %v1750 = vpop.permute.xlu0 %1749
        %1751 = vrot.lane.b32.xlu0 %v970, 96
        %v1752 = vpop.permute.xlu0 %1751
        %1753 = vrot.lane.b32.xlu0 %v971, 96
        %v1754 = vpop.permute.xlu0 %1753
        %1755 = vrot.lane.b32.xlu0 %v972, 96
        %v1756 = vpop.permute.xlu0 %1755
        %1757 = vrot.lane.b32.xlu0 %v973, 96
        %v1758 = vpop.permute.xlu0 %1757
        %1759 = vrot.lane.b32.xlu0 %v974, 96
        %v1760 = vpop.permute.xlu0 %1759
        %1761 = vrot.lane.b32.xlu0 %v975, 96
        %v1762 = vpop.permute.xlu0 %1761
        %1763 = vrot.lane.b32.xlu0 %v976, 96
        %v1764 = vpop.permute.xlu0 %1763
        %1765 = vrot.lane.b32.xlu0 %v977, 96
        %v1766 = vpop.permute.xlu0 %1765
        %1767 = vrot.lane.b32.xlu0 %v978, 96
        %v1768 = vpop.permute.xlu0 %1767
        %1769 = vrot.lane.b32.xlu0 %v979, 96
        %v1770 = vpop.permute.xlu0 %1769
        %1771 = vrot.lane.b32.xlu0 %v980, 96
        %v1772 = vpop.permute.xlu0 %1771
        %1773 = vrot.lane.b32.xlu0 %v981, 96
        %v1774 = vpop.permute.xlu0 %1773
        %1775 = vrot.lane.b32.xlu0 %v982, 96
        %v1776 = vpop.permute.xlu0 %1775
        %1777 = vrot.lane.b32.xlu0 %v983, 96
        %v1778 = vpop.permute.xlu0 %1777
        %1779 = vrot.lane.b32.xlu0 %v984, 96
        %v1780 = vpop.permute.xlu0 %1779
        %1781 = vrot.lane.b32.xlu0 %v985, 96
        %v1782 = vpop.permute.xlu0 %1781
        %1783 = vrot.lane.b32.xlu0 %v986, 96
        %v1784 = vpop.permute.xlu0 %1783
        %1785 = vrot.lane.b32.xlu0 %v987, 96
        %v1786 = vpop.permute.xlu0 %1785
        %1787 = vrot.lane.b32.xlu0 %v988, 96
        %v1788 = vpop.permute.xlu0 %1787
        %1853 = vrot.lane.b32.xlu0 %v989, 112
        %v1854 = vpop.permute.xlu0 %1853
        %1855 = vrot.lane.b32.xlu0 %v990, 112
        %v1856 = vpop.permute.xlu0 %1855
        %1857 = vrot.lane.b32.xlu0 %v991, 112
        %v1858 = vpop.permute.xlu0 %1857
        %1859 = vrot.lane.b32.xlu0 %v992, 112
        %v1860 = vpop.permute.xlu0 %1859
        %1861 = vrot.lane.b32.xlu0 %v993, 112
        %v1862 = vpop.permute.xlu0 %1861
        %1863 = vrot.lane.b32.xlu0 %v994, 112
        %v1864 = vpop.permute.xlu0 %1863
        %1865 = vrot.lane.b32.xlu0 %v995, 112
        %v1866 = vpop.permute.xlu0 %1865
        %1867 = vrot.lane.b32.xlu0 %v996, 112
        %v1868 = vpop.permute.xlu0 %1867
        %1869 = vrot.lane.b32.xlu0 %v997, 112
        %v1870 = vpop.permute.xlu0 %1869
        %1871 = vrot.lane.b32.xlu0 %v998, 112
        %v1872 = vpop.permute.xlu0 %1871
        %1873 = vrot.lane.b32.xlu0 %v999, 112
        %v1874 = vpop.permute.xlu0 %1873
        %1875 = vrot.lane.b32.xlu0 %v1000, 112
        %v1876 = vpop.permute.xlu0 %1875
        %1877 = vrot.lane.b32.xlu0 %v1001, 112
        %v1878 = vpop.permute.xlu0 %1877
        %1879 = vrot.lane.b32.xlu0 %v1002, 112
        %v1880 = vpop.permute.xlu0 %1879
        %1881 = vrot.lane.b32.xlu0 %v1003, 112
        %v1882 = vpop.permute.xlu0 %1881
        %1883 = vrot.lane.b32.xlu0 %v1004, 112
        %v1884 = vpop.permute.xlu0 %1883
        %1885 = vrot.lane.b32.xlu0 %v1005, 112
        %v1886 = vpop.permute.xlu0 %1885
        %1887 = vrot.lane.b32.xlu0 %v1006, 112
        %v1888 = vpop.permute.xlu0 %1887
        %1889 = vrot.lane.b32.xlu0 %v1007, 112
        %v1890 = vpop.permute.xlu0 %1889
        %1891 = vrot.lane.b32.xlu0 %v1008, 112
        %v1892 = vpop.permute.xlu0 %1891
        %1893 = vrot.lane.b32.xlu0 %v1009, 112
        %v1894 = vpop.permute.xlu0 %1893
        %1895 = vrot.lane.b32.xlu0 %v1010, 112
        %v1896 = vpop.permute.xlu0 %1895
        %1897 = vrot.lane.b32.xlu0 %v1011, 112
        %v1898 = vpop.permute.xlu0 %1897
        %1899 = vrot.lane.b32.xlu0 %v1012, 112
        %v1900 = vpop.permute.xlu0 %1899
        %1901 = vrot.lane.b32.xlu0 %v1013, 112
        %v1902 = vpop.permute.xlu0 %1901
        %1903 = vrot.lane.b32.xlu0 %v1014, 112
        %v1904 = vpop.permute.xlu0 %1903
        %1905 = vrot.lane.b32.xlu0 %v1015, 112
        %v1906 = vpop.permute.xlu0 %1905
        %1907 = vrot.lane.b32.xlu0 %v1016, 112
        %v1908 = vpop.permute.xlu0 %1907
        %1909 = vrot.lane.b32.xlu0 %v1017, 112
        %v1910 = vpop.permute.xlu0 %1909
        %1911 = vrot.lane.b32.xlu0 %v1018, 112
        %v1912 = vpop.permute.xlu0 %1911
        %1913 = vrot.lane.b32.xlu0 %v1019, 112
        %v1914 = vpop.permute.xlu0 %1913
        %1915 = vrot.lane.b32.xlu0 %v1020, 112
        %v1916 = vpop.permute.xlu0 %1915
        %v1949 = vsel %vm675, %v764, %v1086
        %v1950 = vsel %vm675, %v765, %v1088
        %v1951 = vsel %vm675, %v766, %v1090
        %v1952 = vsel %vm675, %v767, %v1092
        %v1953 = vsel %vm675, %v768, %v1094
        %v1954 = vsel %vm675, %v769, %v1096
        %v1955 = vsel %vm675, %v770, %v1098
        %v1956 = vsel %vm675, %v771, %v1100
        %v1957 = vsel %vm675, %v772, %v1102
        %v1958 = vsel %vm675, %v773, %v1104
        %v1959 = vsel %vm675, %v774, %v1106
        %v1960 = vsel %vm675, %v775, %v1108
        %v1961 = vsel %vm675, %v776, %v1110
        %v1962 = vsel %vm675, %v777, %v1112
        %v1963 = vsel %vm675, %v778, %v1114
        %v1964 = vsel %vm675, %v779, %v1116
        %v1965 = vsel %vm675, %v780, %v1118
        %v1966 = vsel %vm675, %v781, %v1120
        %v1967 = vsel %vm675, %v782, %v1122
        %v1968 = vsel %vm675, %v783, %v1124
        %v1969 = vsel %vm675, %v784, %v1126
        %v1970 = vsel %vm675, %v785, %v1128
        %v1971 = vsel %vm675, %v786, %v1130
        %v1972 = vsel %vm675, %v787, %v1132
        %v1973 = vsel %vm675, %v788, %v1134
        %v1974 = vsel %vm675, %v789, %v1136
        %v1975 = vsel %vm675, %v790, %v1138
        %v1976 = vsel %vm675, %v791, %v1140
        %v1977 = vsel %vm675, %v792, %v1142
        %v1978 = vsel %vm675, %v793, %v1144
        %v1979 = vsel %vm675, %v794, %v1146
        %v1980 = vsel %vm675, %v795, %v1148
        %vm1981 = vcmask 261120
        %v1982 = vsel %vm1981, %v1949, %v1214
        %v1983 = vsel %vm1981, %v1950, %v1216
        %v1984 = vsel %vm1981, %v1951, %v1218
        %v1985 = vsel %vm1981, %v1952, %v1220
        %v1986 = vsel %vm1981, %v1953, %v1222
        %v1987 = vsel %vm1981, %v1954, %v1224
        %v1988 = vsel %vm1981, %v1955, %v1226
        %v1989 = vsel %vm1981, %v1956, %v1228
        %v1990 = vsel %vm1981, %v1957, %v1230
        %v1991 = vsel %vm1981, %v1958, %v1232
        %v1992 = vsel %vm1981, %v1959, %v1234
        %v1993 = vsel %vm1981, %v1960, %v1236
        %v1994 = vsel %vm1981, %v1961, %v1238
        %v1995 = vsel %vm1981, %v1962, %v1240
        %v1996 = vsel %vm1981, %v1963, %v1242
        %v1997 = vsel %vm1981, %v1964, %v1244
        %v1998 = vsel %vm1981, %v1965, %v1246
        %v1999 = vsel %vm1981, %v1966, %v1248
        %v2000 = vsel %vm1981, %v1967, %v1250
        %v2001 = vsel %vm1981, %v1968, %v1252
        %v2002 = vsel %vm1981, %v1969, %v1254
        %v2003 = vsel %vm1981, %v1970, %v1256
        %v2004 = vsel %vm1981, %v1971, %v1258
        %v2005 = vsel %vm1981, %v1972, %v1260
        %v2006 = vsel %vm1981, %v1973, %v1262
        %v2007 = vsel %vm1981, %v1974, %v1264
        %v2008 = vsel %vm1981, %v1975, %v1266
        %v2009 = vsel %vm1981, %v1976, %v1268
        %v2010 = vsel %vm1981, %v1977, %v1270
        %v2011 = vsel %vm1981, %v1978, %v1272
        %v2012 = vsel %vm1981, %v1979, %v1274
        %v2013 = vsel %vm1981, %v1980, %v1276
        %vm2014 = vcmask 392192
        %v2015 = vsel %vm2014, %v1982, %v1342
        %v2016 = vsel %vm2014, %v1983, %v1344
        %v2017 = vsel %vm2014, %v1984, %v1346
        %v2018 = vsel %vm2014, %v1985, %v1348
        %v2019 = vsel %vm2014, %v1986, %v1350
        %v2020 = vsel %vm2014, %v1987, %v1352
        %v2021 = vsel %vm2014, %v1988, %v1354
        %v2022 = vsel %vm2014, %v1989, %v1356
        %v2023 = vsel %vm2014, %v1990, %v1358
        %v2024 = vsel %vm2014, %v1991, %v1360
        %v2025 = vsel %vm2014, %v1992, %v1362
        %v2026 = vsel %vm2014, %v1993, %v1364
        %v2027 = vsel %vm2014, %v1994, %v1366
        %v2028 = vsel %vm2014, %v1995, %v1368
        %v2029 = vsel %vm2014, %v1996, %v1370
        %v2030 = vsel %vm2014, %v1997, %v1372
        %v2031 = vsel %vm2014, %v1998, %v1374
        %v2032 = vsel %vm2014, %v1999, %v1376
        %v2033 = vsel %vm2014, %v2000, %v1378
        %v2034 = vsel %vm2014, %v2001, %v1380
        %v2035 = vsel %vm2014, %v2002, %v1382
        %v2036 = vsel %vm2014, %v2003, %v1384
        %v2037 = vsel %vm2014, %v2004, %v1386
        %v2038 = vsel %vm2014, %v2005, %v1388
        %v2039 = vsel %vm2014, %v2006, %v1390
        %v2040 = vsel %vm2014, %v2007, %v1392
        %v2041 = vsel %vm2014, %v2008, %v1394
        %v2042 = vsel %vm2014, %v2009, %v1396
        %v2043 = vsel %vm2014, %v2010, %v1398
        %v2044 = vsel %vm2014, %v2011, %v1400
        %v2045 = vsel %vm2014, %v2012, %v1402
        %v2046 = vsel %vm2014, %v2013, %v1404
        %v2047 = vsel %vm433, %v2015, %v1470
        %v2048 = vsel %vm433, %v2016, %v1472
        %v2049 = vsel %vm433, %v2017, %v1474
        %v2050 = vsel %vm433, %v2018, %v1476
        %v2051 = vsel %vm433, %v2019, %v1478
        %v2052 = vsel %vm433, %v2020, %v1480
        %v2053 = vsel %vm433, %v2021, %v1482
        %v2054 = vsel %vm433, %v2022, %v1484
        %v2055 = vsel %vm433, %v2023, %v1486
        %v2056 = vsel %vm433, %v2024, %v1488
        %v2057 = vsel %vm433, %v2025, %v1490
        %v2058 = vsel %vm433, %v2026, %v1492
        %v2059 = vsel %vm433, %v2027, %v1494
        %v2060 = vsel %vm433, %v2028, %v1496
        %v2061 = vsel %vm433, %v2029, %v1498
        %v2062 = vsel %vm433, %v2030, %v1500
        %v2063 = vsel %vm433, %v2031, %v1502
        %v2064 = vsel %vm433, %v2032, %v1504
        %v2065 = vsel %vm433, %v2033, %v1506
        %v2066 = vsel %vm433, %v2034, %v1508
        %v2067 = vsel %vm433, %v2035, %v1510
        %v2068 = vsel %vm433, %v2036, %v1512
        %v2069 = vsel %vm433, %v2037, %v1514
        %v2070 = vsel %vm433, %v2038, %v1516
        %v2071 = vsel %vm433, %v2039, %v1518
        %v2072 = vsel %vm433, %v2040, %v1520
        %v2073 = vsel %vm433, %v2041, %v1522
        %v2074 = vsel %vm433, %v2042, %v1524
        %v2075 = vsel %vm433, %v2043, %v1526
        %v2076 = vsel %vm433, %v2044, %v1528
        %v2077 = vsel %vm433, %v2045, %v1530
        %v2078 = vsel %vm433, %v2046, %v1532
        %vm2079 = vcmask 654336
        %v2080 = vsel %vm2079, %v2047, %v1598
        %v2081 = vsel %vm2079, %v2048, %v1600
        %v2082 = vsel %vm2079, %v2049, %v1602
        %v2083 = vsel %vm2079, %v2050, %v1604
        %v2084 = vsel %vm2079, %v2051, %v1606
        %v2085 = vsel %vm2079, %v2052, %v1608
        %v2086 = vsel %vm2079, %v2053, %v1610
        %v2087 = vsel %vm2079, %v2054, %v1612
        %v2088 = vsel %vm2079, %v2055, %v1614
        %v2089 = vsel %vm2079, %v2056, %v1616
        %v2090 = vsel %vm2079, %v2057, %v1618
        %v2091 = vsel %vm2079, %v2058, %v1620
        %v2092 = vsel %vm2079, %v2059, %v1622
        %v2093 = vsel %vm2079, %v2060, %v1624
        %v2094 = vsel %vm2079, %v2061, %v1626
        %v2095 = vsel %vm2079, %v2062, %v1628
        %v2096 = vsel %vm2079, %v2063, %v1630
        %v2097 = vsel %vm2079, %v2064, %v1632
        %v2098 = vsel %vm2079, %v2065, %v1634
        %v2099 = vsel %vm2079, %v2066, %v1636
        %v2100 = vsel %vm2079, %v2067, %v1638
        %v2101 = vsel %vm2079, %v2068, %v1640
        %v2102 = vsel %vm2079, %v2069, %v1642
        %v2103 = vsel %vm2079, %v2070, %v1644
        %v2104 = vsel %vm2079, %v2071, %v1646
        %v2105 = vsel %vm2079, %v2072, %v1648
        %v2106 = vsel %vm2079, %v2073, %v1650
        %v2107 = vsel %vm2079, %v2074, %v1652
        %v2108 = vsel %vm2079, %v2075, %v1654
        %v2109 = vsel %vm2079, %v2076, %v1656
        %v2110 = vsel %vm2079, %v2077, %v1658
        %v2111 = vsel %vm2079, %v2078, %v1660
        %vm2112 = vcmask 785408
        %v2113 = vsel %vm2112, %v2080, %v1726
        %v2114 = vsel %vm2112, %v2081, %v1728
        %v2115 = vsel %vm2112, %v2082, %v1730
        %v2116 = vsel %vm2112, %v2083, %v1732
        %v2117 = vsel %vm2112, %v2084, %v1734
        %v2118 = vsel %vm2112, %v2085, %v1736
        %v2119 = vsel %vm2112, %v2086, %v1738
        %v2120 = vsel %vm2112, %v2087, %v1740
        %v2121 = vsel %vm2112, %v2088, %v1742
        %v2122 = vsel %vm2112, %v2089, %v1744
        %v2123 = vsel %vm2112, %v2090, %v1746
        %v2124 = vsel %vm2112, %v2091, %v1748
        %v2125 = vsel %vm2112, %v2092, %v1750
        %v2126 = vsel %vm2112, %v2093, %v1752
        %v2127 = vsel %vm2112, %v2094, %v1754
        %v2128 = vsel %vm2112, %v2095, %v1756
        %v2129 = vsel %vm2112, %v2096, %v1758
        %v2130 = vsel %vm2112, %v2097, %v1760
        %v2131 = vsel %vm2112, %v2098, %v1762
        %v2132 = vsel %vm2112, %v2099, %v1764
        %v2133 = vsel %vm2112, %v2100, %v1766
        %v2134 = vsel %vm2112, %v2101, %v1768
        %v2135 = vsel %vm2112, %v2102, %v1770
        %v2136 = vsel %vm2112, %v2103, %v1772
        %v2137 = vsel %vm2112, %v2104, %v1774
        %v2138 = vsel %vm2112, %v2105, %v1776
        %v2139 = vsel %vm2112, %v2106, %v1778
        %v2140 = vsel %vm2112, %v2107, %v1780
        %v2141 = vsel %vm2112, %v2108, %v1782
        %v2142 = vsel %vm2112, %v2109, %v1784
        %v2143 = vsel %vm2112, %v2110, %v1786
        %v2144 = vsel %vm2112, %v2111, %v1788
        %vm2145 = vcmask 916480
        %v2146 = vsel %vm2145, %v2113, %v1854
        %v2147 = vsel %vm2145, %v2114, %v1856
        %v2148 = vsel %vm2145, %v2115, %v1858
        %v2149 = vsel %vm2145, %v2116, %v1860
        %v2150 = vsel %vm2145, %v2117, %v1862
        %v2151 = vsel %vm2145, %v2118, %v1864
        %v2152 = vsel %vm2145, %v2119, %v1866
        %v2153 = vsel %vm2145, %v2120, %v1868
        %v2154 = vsel %vm2145, %v2121, %v1870
        %v2155 = vsel %vm2145, %v2122, %v1872
        %v2156 = vsel %vm2145, %v2123, %v1874
        %v2157 = vsel %vm2145, %v2124, %v1876
        %v2158 = vsel %vm2145, %v2125, %v1878
        %v2159 = vsel %vm2145, %v2126, %v1880
        %v2160 = vsel %vm2145, %v2127, %v1882
        %v2161 = vsel %vm2145, %v2128, %v1884
        %v2162 = vsel %vm2145, %v2129, %v1886
        %v2163 = vsel %vm2145, %v2130, %v1888
        %v2164 = vsel %vm2145, %v2131, %v1890
        %v2165 = vsel %vm2145, %v2132, %v1892
        %v2166 = vsel %vm2145, %v2133, %v1894
        %v2167 = vsel %vm2145, %v2134, %v1896
        %v2168 = vsel %vm2145, %v2135, %v1898
        %v2169 = vsel %vm2145, %v2136, %v1900
        %v2170 = vsel %vm2145, %v2137, %v1902
        %v2171 = vsel %vm2145, %v2138, %v1904
        %v2172 = vsel %vm2145, %v2139, %v1906
        %v2173 = vsel %vm2145, %v2140, %v1908
        %v2174 = vsel %vm2145, %v2141, %v1910
        %v2175 = vsel %vm2145, %v2142, %v1912
        %v2176 = vsel %vm2145, %v2143, %v1914
        %v2177 = vsel %vm2145, %v2144, %v1916
        %v2178 = vpack.c.bf16 %v2147, %v2146
        %v2179 = vpack.c.bf16 %v1022, %v1021
        %v2180 = vpack.c.bf16 %v2149, %v2148
        %v2181 = vpack.c.bf16 %v1024, %v1023
        %v2182 = vpack.c.bf16 %v2151, %v2150
        %v2183 = vpack.c.bf16 %v1026, %v1025
        %v2184 = vpack.c.bf16 %v2153, %v2152
        %v2185 = vpack.c.bf16 %v1028, %v1027
        %v2186 = vpack.c.bf16 %v2155, %v2154
        %v2187 = vpack.c.bf16 %v1030, %v1029
        %v2188 = vpack.c.bf16 %v2157, %v2156
        %v2189 = vpack.c.bf16 %v1032, %v1031
        %v2190 = vpack.c.bf16 %v2159, %v2158
        %v2191 = vpack.c.bf16 %v1034, %v1033
        %v2192 = vpack.c.bf16 %v2161, %v2160
        %v2193 = vpack.c.bf16 %v1036, %v1035
        %v2194 = vpack.c.bf16 %v2163, %v2162
        %v2195 = vpack.c.bf16 %v1038, %v1037
        %v2196 = vpack.c.bf16 %v2165, %v2164
        %v2197 = vpack.c.bf16 %v1040, %v1039
        %v2198 = vpack.c.bf16 %v2167, %v2166
        %v2199 = vpack.c.bf16 %v1042, %v1041
        %v2200 = vpack.c.bf16 %v2169, %v2168
        %v2201 = vpack.c.bf16 %v1044, %v1043
        %v2202 = vpack.c.bf16 %v2171, %v2170
        %v2203 = vpack.c.bf16 %v1046, %v1045
        %v2204 = vpack.c.bf16 %v2173, %v2172
        %v2205 = vpack.c.bf16 %v1048, %v1047
        %v2206 = vpack.c.bf16 %v2175, %v2174
        %v2207 = vpack.c.bf16 %v1050, %v1049
        %v2208 = vpack.c.bf16 %v2177, %v2176
        %v2209 = vpack.c.bf16 %v1052, %v1051
        %v2210 = vld [vmem:[%s3] sm:$0xf]
        %v2211 = vld [vmem:[%s3 + $0x4] sm:$0xf]
        %v2212 = vld [vmem:[%s3 + $0x8] sm:$0xf]
        %v2213 = vld [vmem:[%s3 + $0xc] sm:$0xf]
        %v2214 = vld [vmem:[%s3 + $0x10] sm:$0xf]
        %v2215 = vld [vmem:[%s3 + $0x14] sm:$0xf]
        %v2216 = vld [vmem:[%s3 + $0x18] sm:$0xf]
        %v2217 = vld [vmem:[%s3 + $0x1c] sm:$0xf]
        %v2218 = vld [vmem:[%s3 + $0x20] sm:$0xf]
        %v2219 = vld [vmem:[%s3 + $0x24] sm:$0xf]
        %v2220 = vld [vmem:[%s3 + $0x28] sm:$0xf]
        %v2221 = vld [vmem:[%s3 + $0x2c] sm:$0xf]
        %v2222 = vld [vmem:[%s3 + $0x30] sm:$0xf]
        %v2223 = vld [vmem:[%s3 + $0x34] sm:$0xf]
        %v2224 = vld [vmem:[%s3 + $0x38] sm:$0xf]
        %v2225 = vld [vmem:[%s3 + $0x3c] sm:$0xf]
        %v2226 = vld [vmem:[%s3 + $0x40] sm:$0xf]
        %v2227 = vld [vmem:[%s3 + $0x44] sm:$0xf]
        %v2228 = vld [vmem:[%s4] sm:$0x1]
        %v2230 = vlaneseq
        %v2231 = vshrl.u32 %v2230, 7
        %v2232 = vsub.s32 0, %v2231
        %v2233 = vrot.slane %v2228, %v2232
        %v2253 = vunpack.c.l.b16 %v2210
        %v2254 = vunpack.c.l.b16 %v2211
        %v2255 = vunpack.c.l.b16 %v2212
        %v2256 = vunpack.c.l.b16 %v2213
        %v2257 = vunpack.c.l.b16 %v2214
        %v2258 = vunpack.c.l.b16 %v2215
        %v2259 = vunpack.c.l.b16 %v2216
        %v2260 = vunpack.c.l.b16 %v2217
        %v2261 = vunpack.c.l.b16 %v2218
        %v2262 = vunpack.c.l.b16 %v2219
        %v2263 = vunpack.c.l.b16 %v2220
        %v2264 = vunpack.c.l.b16 %v2221
        %v2265 = vunpack.c.l.b16 %v2222
        %v2266 = vunpack.c.l.b16 %v2223
        %v2267 = vunpack.c.l.b16 %v2224
        %v2268 = vunpack.c.l.b16 %v2225
        %v2269 = vunpack.c.l.b16 %v2226
        %v2270 = vunpack.c.l.b16 %v2227
        %v2271 = vpack.c.b16 %v2254, %v2253
        %v2272 = vpack.c.b16 %v2256, %v2255
        %v2273 = vpack.c.b16 %v2258, %v2257
        %v2274 = vpack.c.b16 %v2260, %v2259
        %v2275 = vpack.c.b16 %v2262, %v2261
        %v2276 = vpack.c.b16 %v2264, %v2263
        %v2277 = vpack.c.b16 %v2266, %v2265
        %v2278 = vpack.c.b16 %v2268, %v2267
        %v2279 = vpack.c.b16 %v2270, %v2269
        %v2290 = vsel %vm675, %v2179, 0
        %v2293 = vsel %vm675, %v2181, 0
        %v2296 = vsel %vm675, %v2183, 0
        %v2299 = vsel %vm675, %v2185, 0
        %v2302 = vsel %vm675, %v2187, 0
        %v2305 = vsel %vm675, %v2189, 0
        %v2308 = vsel %vm675, %v2191, 0
        %v2311 = vsel %vm675, %v2193, 0
        %v2314 = vsel %vm675, %v2195, 0
        %v2317 = vsel %vm675, %v2197, 0
        %v2320 = vsel %vm675, %v2199, 0
        %v2323 = vsel %vm675, %v2201, 0
        %v2326 = vsel %vm675, %v2203, 0
        %v2329 = vsel %vm675, %v2205, 0
        %v2332 = vsel %vm675, %v2207, 0
        %v2335 = vsel %vm675, %v2209, 0
        %2337 = vmatprep.subr.bf16.mxu0 0
        %2338 = vmatpush1.bf16.msra.mxu0 %v2271
        %2339 = vmatprep.subr.bf16.mxu0 0
        %2340 = vmatpush1.bf16.msra.mxu0 %v2272
        %2341 = vmatprep.subr.bf16.mxu0 0
        %2342 = vmatpush1.bf16.msra.mxu0 %v2273
        %2343 = vmatprep.subr.bf16.mxu0 0
        %2344 = vmatpush1.bf16.msra.mxu0 %v2274
        %2345 = vmatprep.subr.bf16.mxu0 0
        %2346 = vmatpush1.bf16.msra.mxu0 %v2275
        %2347 = vmatprep.subr.bf16.mxu0 0
        %2348 = vmatpush1.bf16.msra.mxu0 %v2276
        %2349 = vmatprep.subr.bf16.mxu0 0
        %2350 = vmatpush1.bf16.msra.mxu0 %v2277
        %2351 = vmatprep.subr.bf16.mxu0 0
        %2352 = vmatpush1.bf16.msra.mxu0 %v2278
        %2353 = vmatprep.subr.bf16.mxu0 0
        %2354 = vmatpush1.bf16.msra.mxu0 %v2279
        %2355 = vmatprep.subr.bf16.mxu0 0
        %2356 = vmatpush1.bf16.msra.mxu0 0
        %2357 = vmatprep.subr.bf16.mxu0 0
        %2358 = vmatpush1.bf16.msra.mxu0 0
        %2359 = vmatprep.subr.bf16.mxu0 0
        %2360 = vmatpush1.bf16.msra.mxu0 0
        %2361 = vmatprep.subr.bf16.mxu0 0
        %2362 = vmatpush1.bf16.msra.mxu0 0
        %2363 = vmatprep.subr.bf16.mxu0 0
        %2364 = vmatpush1.bf16.msra.mxu0 0
        %2365 = vmatprep.subr.bf16.mxu0 0
        %2366 = vmatpush1.bf16.msra.mxu0 0
        %2367 = vmatprep.subr.bf16.mxu0 0
        %2368 = vmatpush1.bf16.msra.mxu0 0
        %2369 = vmatprep.mubr.bf16.mxu0 %v2290
        %2370 = vmatmul.mubr.bf16.gmra.mrb[0].mxu0 %v2178
        %v2371 = vpop.f32.mrb[0].mxu0
        %v2372 = vadd.f32 %v2233, %v2371
        %v2373 = vpop.f32.mrb[0].mxu0
        %v2374 = vpop.f32.mrb[0].mxu0
        %v2375 = vadd.f32 %v2233, %v2374
        %v2376 = vpop.f32.mrb[0].mxu0
        %2377 = vmatprep.mubr.bf16.mxu0 %v2293
        %2378 = vmatmul.mubr.bf16.gmra.mrb[0].mxu0 %v2180
        %v2379 = vpop.f32.mrb[0].mxu0
        %v2380 = vadd.f32 %v2233, %v2379
        %v2381 = vpop.f32.mrb[0].mxu0
        %v2382 = vpop.f32.mrb[0].mxu0
        %v2383 = vadd.f32 %v2233, %v2382
        %v2384 = vpop.f32.mrb[0].mxu0
        %2385 = vmatprep.mubr.bf16.mxu0 %v2296
        %2386 = vmatmul.mubr.bf16.gmra.mrb[0].mxu0 %v2182
        %v2387 = vpop.f32.mrb[0].mxu0
        %v2388 = vadd.f32 %v2233, %v2387
        %v2389 = vpop.f32.mrb[0].mxu0
        %v2390 = vpop.f32.mrb[0].mxu0
        %v2391 = vadd.f32 %v2233, %v2390
        %v2392 = vpop.f32.mrb[0].mxu0
        %2393 = vmatprep.mubr.bf16.mxu0 %v2299
        %2394 = vmatmul.mubr.bf16.gmra.mrb[0].mxu0 %v2184
        %v2395 = vpop.f32.mrb[0].mxu0
        %v2396 = vadd.f32 %v2233, %v2395
        %v2397 = vpop.f32.mrb[0].mxu0
        %v2398 = vpop.f32.mrb[0].mxu0
        %v2399 = vadd.f32 %v2233, %v2398
        %v2400 = vpop.f32.mrb[0].mxu0
        %2401 = vmatprep.mubr.bf16.mxu0 %v2302
        %2402 = vmatmul.mubr.bf16.gmra.mrb[0].mxu0 %v2186
        %v2403 = vpop.f32.mrb[0].mxu0
        %v2404 = vadd.f32 %v2233, %v2403
        %v2405 = vpop.f32.mrb[0].mxu0
        %v2406 = vpop.f32.mrb[0].mxu0
        %v2407 = vadd.f32 %v2233, %v2406
        %v2408 = vpop.f32.mrb[0].mxu0
        %2409 = vmatprep.mubr.bf16.mxu0 %v2305
        %2410 = vmatmul.mubr.bf16.gmra.mrb[0].mxu0 %v2188
        %v2411 = vpop.f32.mrb[0].mxu0
        %v2412 = vadd.f32 %v2233, %v2411
        %v2413 = vpop.f32.mrb[0].mxu0
        %v2414 = vpop.f32.mrb[0].mxu0
        %v2415 = vadd.f32 %v2233, %v2414
        %v2416 = vpop.f32.mrb[0].mxu0
        %2417 = vmatprep.mubr.bf16.mxu0 %v2308
        %2418 = vmatmul.mubr.bf16.gmra.mrb[0].mxu0 %v2190
        %v2419 = vpop.f32.mrb[0].mxu0
        %v2420 = vadd.f32 %v2233, %v2419
        %v2421 = vpop.f32.mrb[0].mxu0
        %v2422 = vpop.f32.mrb[0].mxu0
        %v2423 = vadd.f32 %v2233, %v2422
        %v2424 = vpop.f32.mrb[0].mxu0
        %2425 = vmatprep.mubr.bf16.mxu0 %v2311
        %2426 = vmatmul.mubr.bf16.gmra.mrb[0].mxu0 %v2192
        %v2427 = vpop.f32.mrb[0].mxu0
        %v2428 = vadd.f32 %v2233, %v2427
        %v2429 = vpop.f32.mrb[0].mxu0
        %v2430 = vpop.f32.mrb[0].mxu0
        %v2431 = vadd.f32 %v2233, %v2430
        %v2432 = vpop.f32.mrb[0].mxu0
        %2433 = vmatprep.mubr.bf16.mxu0 %v2314
        %2434 = vmatmul.mubr.bf16.gmra.mrb[0].mxu0 %v2194
        %v2435 = vpop.f32.mrb[0].mxu0
        %v2436 = vadd.f32 %v2233, %v2435
        %v2437 = vpop.f32.mrb[0].mxu0
        %v2438 = vpop.f32.mrb[0].mxu0
        %v2439 = vadd.f32 %v2233, %v2438
        %v2440 = vpop.f32.mrb[0].mxu0
        %2441 = vmatprep.mubr.bf16.mxu0 %v2317
        %2442 = vmatmul.mubr.bf16.gmra.mrb[0].mxu0 %v2196
        %v2443 = vpop.f32.mrb[0].mxu0
        %v2444 = vadd.f32 %v2233, %v2443
        %v2445 = vpop.f32.mrb[0].mxu0
        %v2446 = vpop.f32.mrb[0].mxu0
        %v2447 = vadd.f32 %v2233, %v2446
        %v2448 = vpop.f32.mrb[0].mxu0
        %2449 = vmatprep.mubr.bf16.mxu0 %v2320
        %2450 = vmatmul.mubr.bf16.gmra.mrb[0].mxu0 %v2198
        %v2451 = vpop.f32.mrb[0].mxu0
        %v2452 = vadd.f32 %v2233, %v2451
        %v2453 = vpop.f32.mrb[0].mxu0
        %v2454 = vpop.f32.mrb[0].mxu0
        %v2455 = vadd.f32 %v2233, %v2454
        %v2456 = vpop.f32.mrb[0].mxu0
        %2457 = vmatprep.mubr.bf16.mxu0 %v2323
        %2458 = vmatmul.mubr.bf16.gmra.mrb[0].mxu0 %v2200
        %v2459 = vpop.f32.mrb[0].mxu0
        %v2460 = vadd.f32 %v2233, %v2459
        %v2461 = vpop.f32.mrb[0].mxu0
        %v2462 = vpop.f32.mrb[0].mxu0
        %v2463 = vadd.f32 %v2233, %v2462
        %v2464 = vpop.f32.mrb[0].mxu0
        %2465 = vmatprep.mubr.bf16.mxu0 %v2326
        %2466 = vmatmul.mubr.bf16.gmra.mrb[0].mxu0 %v2202
        %v2467 = vpop.f32.mrb[0].mxu0
        %v2468 = vadd.f32 %v2233, %v2467
        %v2469 = vpop.f32.mrb[0].mxu0
        %v2470 = vpop.f32.mrb[0].mxu0
        %v2471 = vadd.f32 %v2233, %v2470
        %v2472 = vpop.f32.mrb[0].mxu0
        %2473 = vmatprep.mubr.bf16.mxu0 %v2329
        %2474 = vmatmul.mubr.bf16.gmra.mrb[0].mxu0 %v2204
        %v2475 = vpop.f32.mrb[0].mxu0
        %v2476 = vadd.f32 %v2233, %v2475
        %v2477 = vpop.f32.mrb[0].mxu0
        %v2478 = vpop.f32.mrb[0].mxu0
        %v2479 = vadd.f32 %v2233, %v2478
        %v2480 = vpop.f32.mrb[0].mxu0
        %2481 = vmatprep.mubr.bf16.mxu0 %v2332
        %2482 = vmatmul.mubr.bf16.gmra.mrb[0].mxu0 %v2206
        %v2483 = vpop.f32.mrb[0].mxu0
        %v2484 = vadd.f32 %v2233, %v2483
        %v2485 = vpop.f32.mrb[0].mxu0
        %v2486 = vpop.f32.mrb[0].mxu0
        %v2487 = vadd.f32 %v2233, %v2486
        %v2488 = vpop.f32.mrb[0].mxu0
        %2489 = vmatprep.mubr.bf16.mxu0 %v2335
        %2490 = vmatmul.mubr.bf16.gmra.mrb[0].mxu0 %v2208
        %v2491 = vpop.f32.mrb[0].mxu0
        %v2492 = vadd.f32 %v2233, %v2491
        %v2493 = vpop.f32.mrb[0].mxu0
        %v2494 = vpop.f32.mrb[0].mxu0
        %v2495 = vadd.f32 %v2233, %v2494
        %v2496 = vpop.f32.mrb[0].mxu0
        %2497 = vdwg.mxu0
        %v2498 = vmax.f32 %v2372, 0.0
        %v2499 = vmax.f32 %v2375, 0.0
        %v2500 = vmax.f32 %v2380, 0.0
        %v2501 = vmax.f32 %v2383, 0.0
        %v2502 = vmax.f32 %v2388, 0.0
        %v2503 = vmax.f32 %v2391, 0.0
        %v2504 = vmax.f32 %v2396, 0.0
        %v2505 = vmax.f32 %v2399, 0.0
        %v2506 = vmax.f32 %v2404, 0.0
        %v2507 = vmax.f32 %v2407, 0.0
        %v2508 = vmax.f32 %v2412, 0.0
        %v2509 = vmax.f32 %v2415, 0.0
        %v2510 = vmax.f32 %v2420, 0.0
        %v2511 = vmax.f32 %v2423, 0.0
        %v2512 = vmax.f32 %v2428, 0.0
        %v2513 = vmax.f32 %v2431, 0.0
        %v2514 = vmax.f32 %v2436, 0.0
        %v2515 = vmax.f32 %v2439, 0.0
        %v2516 = vmax.f32 %v2444, 0.0
        %v2517 = vmax.f32 %v2447, 0.0
        %v2518 = vmax.f32 %v2452, 0.0
        %v2519 = vmax.f32 %v2455, 0.0
        %v2520 = vmax.f32 %v2460, 0.0
        %v2521 = vmax.f32 %v2463, 0.0
        %v2522 = vmax.f32 %v2468, 0.0
        %v2523 = vmax.f32 %v2471, 0.0
        %v2524 = vmax.f32 %v2476, 0.0
        %v2525 = vmax.f32 %v2479, 0.0
        %v2526 = vmax.f32 %v2484, 0.0
        %v2527 = vmax.f32 %v2487, 0.0
        %v2528 = vmax.f32 %v2492, 0.0
        %v2529 = vmax.f32 %v2495, 0.0
        %v2530 = vpack.c.bf16 %v2499, %v2498
        %v2531 = vpack.c.bf16 %v2501, %v2500
        %v2532 = vpack.c.bf16 %v2503, %v2502
        %v2533 = vpack.c.bf16 %v2505, %v2504
        %v2534 = vpack.c.bf16 %v2507, %v2506
        %v2535 = vpack.c.bf16 %v2509, %v2508
        %v2536 = vpack.c.bf16 %v2511, %v2510
        %v2537 = vpack.c.bf16 %v2513, %v2512
        %v2538 = vpack.c.bf16 %v2515, %v2514
        %v2539 = vpack.c.bf16 %v2517, %v2516
        %v2540 = vpack.c.bf16 %v2519, %v2518
        %v2541 = vpack.c.bf16 %v2521, %v2520
        %v2542 = vpack.c.bf16 %v2523, %v2522
        %v2543 = vpack.c.bf16 %v2525, %v2524
        %v2544 = vpack.c.bf16 %v2527, %v2526
        %v2545 = vpack.c.bf16 %v2529, %v2528
        %v2546 = vld [vmem:[%s5] sm:$0xf]
        %v2547 = vld [vmem:[%s5 + $0x4] sm:$0xf]
        %v2548 = vld [vmem:[%s6] sm:$0x1]
        %v2550 = vlaneseq
        %v2551 = vshrl.u32 %v2550, 7
        %v2552 = vsub.s32 0, %v2551
        %v2553 = vrot.slane %v2548, %v2552
        %v2557 = vunpack.c.l.b16 %v2546
        %v2558 = vunpack.c.l.b16 %v2547
        %v2559 = vpack.c.b16 %v2558, %v2557
        %v2562 = vsel %vm675, %v2530, 0
        %v2565 = vsel %vm675, %v2531, 0
        %v2568 = vsel %vm675, %v2532, 0
        %v2571 = vsel %vm675, %v2533, 0
        %v2574 = vsel %vm675, %v2534, 0
        %v2577 = vsel %vm675, %v2535, 0
        %v2580 = vsel %vm675, %v2536, 0
        %v2583 = vsel %vm675, %v2537, 0
        %v2586 = vsel %vm675, %v2538, 0
        %v2589 = vsel %vm675, %v2539, 0
        %v2592 = vsel %vm675, %v2540, 0
        %v2595 = vsel %vm675, %v2541, 0
        %v2598 = vsel %vm675, %v2542, 0
        %v2601 = vsel %vm675, %v2543, 0
        %v2604 = vsel %vm675, %v2544, 0
        %v2607 = vsel %vm675, %v2545, 0
        %2609 = vmatprep.subr.bf16.mxu0 0
        %2610 = vmatpush1.bf16.msra.mxu0 %v2559
        %2611 = vmatprep.subr.bf16.mxu0 0
        %2612 = vmatpush1.bf16.msra.mxu0 0
        %2613 = vmatprep.subr.bf16.mxu0 0
        %2614 = vmatpush1.bf16.msra.mxu0 0
        %2615 = vmatprep.subr.bf16.mxu0 0
        %2616 = vmatpush1.bf16.msra.mxu0 0
        %2617 = vmatprep.subr.bf16.mxu0 0
        %2618 = vmatpush1.bf16.msra.mxu0 0
        %2619 = vmatprep.subr.bf16.mxu0 0
        %2620 = vmatpush1.bf16.msra.mxu0 0
        %2621 = vmatprep.subr.bf16.mxu0 0
        %2622 = vmatpush1.bf16.msra.mxu0 0
        %2623 = vmatprep.subr.bf16.mxu0 0
        %2624 = vmatpush1.bf16.msra.mxu0 0
        %2625 = vmatprep.subr.bf16.mxu0 0
        %2626 = vmatpush1.bf16.msra.mxu0 0
        %2627 = vmatprep.subr.bf16.mxu0 0
        %2628 = vmatpush1.bf16.msra.mxu0 0
        %2629 = vmatprep.subr.bf16.mxu0 0
        %2630 = vmatpush1.bf16.msra.mxu0 0
        %2631 = vmatprep.subr.bf16.mxu0 0
        %2632 = vmatpush1.bf16.msra.mxu0 0
        %2633 = vmatprep.subr.bf16.mxu0 0
        %2634 = vmatpush1.bf16.msra.mxu0 0
        %2635 = vmatprep.subr.bf16.mxu0 0
        %2636 = vmatpush1.bf16.msra.mxu0 0
        %2637 = vmatprep.subr.bf16.mxu0 0
        %2638 = vmatpush1.bf16.msra.mxu0 0
        %2639 = vmatprep.subr.bf16.mxu0 0
        %2640 = vmatpush1.bf16.msra.mxu0 0
        %2641 = vmatprep.mubr.bf16.mxu0 0
        %2642 = vmatmul.mubr.bf16.gmra.mrb[0].mxu0 %v2562
        %v2643 = vpop.f32.mrb[0].mxu0
        %v2644 = vadd.f32 %v2553, %v2643
        %v2645 = vpop.f32.mrb[0].mxu0
        %v2646 = vpop.f32.mrb[0].mxu0
        %v2647 = vadd.f32 %v2553, %v2646
        %v2648 = vpop.f32.mrb[0].mxu0
        %2649 = vmatprep.mubr.bf16.mxu0 0
        %2650 = vmatmul.mubr.bf16.gmra.mrb[0].mxu0 %v2565
        %v2651 = vpop.f32.mrb[0].mxu0
        %v2652 = vadd.f32 %v2553, %v2651
        %v2653 = vpop.f32.mrb[0].mxu0
        %v2654 = vpop.f32.mrb[0].mxu0
        %v2655 = vadd.f32 %v2553, %v2654
        %v2656 = vpop.f32.mrb[0].mxu0
        %2657 = vmatprep.mubr.bf16.mxu0 0
        %2658 = vmatmul.mubr.bf16.gmra.mrb[0].mxu0 %v2568
        %v2659 = vpop.f32.mrb[0].mxu0
        %v2660 = vadd.f32 %v2553, %v2659
        %v2661 = vpop.f32.mrb[0].mxu0
        %v2662 = vpop.f32.mrb[0].mxu0
        %v2663 = vadd.f32 %v2553, %v2662
        %v2664 = vpop.f32.mrb[0].mxu0
        %2665 = vmatprep.mubr.bf16.mxu0 0
        %2666 = vmatmul.mubr.bf16.gmra.mrb[0].mxu0 %v2571
        %v2667 = vpop.f32.mrb[0].mxu0
        %v2668 = vadd.f32 %v2553, %v2667
        %v2669 = vpop.f32.mrb[0].mxu0
        %v2670 = vpop.f32.mrb[0].mxu0
        %v2671 = vadd.f32 %v2553, %v2670
        %v2672 = vpop.f32.mrb[0].mxu0
        %2673 = vmatprep.mubr.bf16.mxu0 0
        %2674 = vmatmul.mubr.bf16.gmra.mrb[0].mxu0 %v2574
        %v2675 = vpop.f32.mrb[0].mxu0
        %v2676 = vadd.f32 %v2553, %v2675
        %v2677 = vpop.f32.mrb[0].mxu0
        %v2678 = vpop.f32.mrb[0].mxu0
        %v2679 = vadd.f32 %v2553, %v2678
        %v2680 = vpop.f32.mrb[0].mxu0
        %2681 = vmatprep.mubr.bf16.mxu0 0
        %2682 = vmatmul.mubr.bf16.gmra.mrb[0].mxu0 %v2577
        %v2683 = vpop.f32.mrb[0].mxu0
        %v2684 = vadd.f32 %v2553, %v2683
        %v2685 = vpop.f32.mrb[0].mxu0
        %v2686 = vpop.f32.mrb[0].mxu0
        %v2687 = vadd.f32 %v2553, %v2686
        %v2688 = vpop.f32.mrb[0].mxu0
        %2689 = vmatprep.mubr.bf16.mxu0 0
        %2690 = vmatmul.mubr.bf16.gmra.mrb[0].mxu0 %v2580
        %v2691 = vpop.f32.mrb[0].mxu0
        %v2692 = vadd.f32 %v2553, %v2691
        %v2693 = vpop.f32.mrb[0].mxu0
        %v2694 = vpop.f32.mrb[0].mxu0
        %v2695 = vadd.f32 %v2553, %v2694
        %v2696 = vpop.f32.mrb[0].mxu0
        %2697 = vmatprep.mubr.bf16.mxu0 0
        %2698 = vmatmul.mubr.bf16.gmra.mrb[0].mxu0 %v2583
        %v2699 = vpop.f32.mrb[0].mxu0
        %v2700 = vadd.f32 %v2553, %v2699
        %v2701 = vpop.f32.mrb[0].mxu0
        %v2702 = vpop.f32.mrb[0].mxu0
        %v2703 = vadd.f32 %v2553, %v2702
        %v2704 = vpop.f32.mrb[0].mxu0
        %2705 = vmatprep.mubr.bf16.mxu0 0
        %2706 = vmatmul.mubr.bf16.gmra.mrb[0].mxu0 %v2586
        %v2707 = vpop.f32.mrb[0].mxu0
        %v2708 = vadd.f32 %v2553, %v2707
        %v2709 = vpop.f32.mrb[0].mxu0
        %v2710 = vpop.f32.mrb[0].mxu0
        %v2711 = vadd.f32 %v2553, %v2710
        %v2712 = vpop.f32.mrb[0].mxu0
        %2713 = vmatprep.mubr.bf16.mxu0 0
        %2714 = vmatmul.mubr.bf16.gmra.mrb[0].mxu0 %v2589
        %v2715 = vpop.f32.mrb[0].mxu0
        %v2716 = vadd.f32 %v2553, %v2715
        %v2717 = vpop.f32.mrb[0].mxu0
        %v2718 = vpop.f32.mrb[0].mxu0
        %v2719 = vadd.f32 %v2553, %v2718
        %v2720 = vpop.f32.mrb[0].mxu0
        %2721 = vmatprep.mubr.bf16.mxu0 0
        %2722 = vmatmul.mubr.bf16.gmra.mrb[0].mxu0 %v2592
        %v2723 = vpop.f32.mrb[0].mxu0
        %v2724 = vadd.f32 %v2553, %v2723
        %v2725 = vpop.f32.mrb[0].mxu0
        %v2726 = vpop.f32.mrb[0].mxu0
        %v2727 = vadd.f32 %v2553, %v2726
        %v2728 = vpop.f32.mrb[0].mxu0
        %2729 = vmatprep.mubr.bf16.mxu0 0
        %2730 = vmatmul.mubr.bf16.gmra.mrb[0].mxu0 %v2595
        %v2731 = vpop.f32.mrb[0].mxu0
        %v2732 = vadd.f32 %v2553, %v2731
        %v2733 = vpop.f32.mrb[0].mxu0
        %v2734 = vpop.f32.mrb[0].mxu0
        %v2735 = vadd.f32 %v2553, %v2734
        %v2736 = vpop.f32.mrb[0].mxu0
        %2737 = vmatprep.mubr.bf16.mxu0 0
        %2738 = vmatmul.mubr.bf16.gmra.mrb[0].mxu0 %v2598
        %v2739 = vpop.f32.mrb[0].mxu0
        %v2740 = vadd.f32 %v2553, %v2739
        %v2741 = vpop.f32.mrb[0].mxu0
        %v2742 = vpop.f32.mrb[0].mxu0
        %v2743 = vadd.f32 %v2553, %v2742
        %v2744 = vpop.f32.mrb[0].mxu0
        %2745 = vmatprep.mubr.bf16.mxu0 0
        %2746 = vmatmul.mubr.bf16.gmra.mrb[0].mxu0 %v2601
        %v2747 = vpop.f32.mrb[0].mxu0
        %v2748 = vadd.f32 %v2553, %v2747
        %v2749 = vpop.f32.mrb[0].mxu0
        %v2750 = vpop.f32.mrb[0].mxu0
        %v2751 = vadd.f32 %v2553, %v2750
        %v2752 = vpop.f32.mrb[0].mxu0
        %2753 = vmatprep.mubr.bf16.mxu0 0
        %2754 = vmatmul.mubr.bf16.gmra.mrb[0].mxu0 %v2604
        %v2755 = vpop.f32.mrb[0].mxu0
        %v2756 = vadd.f32 %v2553, %v2755
        %v2757 = vpop.f32.mrb[0].mxu0
        %v2758 = vpop.f32.mrb[0].mxu0
        %v2759 = vadd.f32 %v2553, %v2758
        %v2760 = vpop.f32.mrb[0].mxu0
        %2761 = vmatprep.mubr.bf16.mxu0 0
        %2762 = vmatmul.mubr.bf16.gmra.mrb[0].mxu0 %v2607
        %v2763 = vpop.f32.mrb[0].mxu0
        %v2764 = vadd.f32 %v2553, %v2763
        %v2765 = vpop.f32.mrb[0].mxu0
        %v2766 = vpop.f32.mrb[0].mxu0
        %v2767 = vadd.f32 %v2553, %v2766
        %v2768 = vpop.f32.mrb[0].mxu0
        %2769 = vdwg.mxu0
        %v2770 = vadd.f32 %v2644, %v330
        %v2771 = vadd.f32 %v2647, %v331
        %v2772 = vadd.f32 %v2652, %v332
        %v2773 = vadd.f32 %v2655, %v333
        %v2774 = vadd.f32 %v2660, %v334
        %v2775 = vadd.f32 %v2663, %v335
        %v2776 = vadd.f32 %v2668, %v336
        %v2777 = vadd.f32 %v2671, %v337
        %v2778 = vadd.f32 %v2676, %v338
        %v2779 = vadd.f32 %v2679, %v339
        %v2780 = vadd.f32 %v2684, %v340
        %v2781 = vadd.f32 %v2687, %v341
        %v2782 = vadd.f32 %v2692, %v342
        %v2783 = vadd.f32 %v2695, %v343
        %v2784 = vadd.f32 %v2700, %v344
        %v2785 = vadd.f32 %v2703, %v345
        %v2786 = vadd.f32 %v2708, %v362
        %v2787 = vadd.f32 %v2711, %v363
        %v2788 = vadd.f32 %v2716, %v364
        %v2789 = vadd.f32 %v2719, %v365
        %v2790 = vadd.f32 %v2724, %v366
        %v2791 = vadd.f32 %v2727, %v367
        %v2792 = vadd.f32 %v2732, %v368
        %v2793 = vadd.f32 %v2735, %v369
        %v2794 = vadd.f32 %v2740, %v370
        %v2795 = vadd.f32 %v2743, %v371
        %v2796 = vadd.f32 %v2748, %v372
        %v2797 = vadd.f32 %v2751, %v373
        %v2798 = vadd.f32 %v2756, %v374
        %v2799 = vadd.f32 %v2759, %v375
        %v2800 = vadd.f32 %v2764, %v376
        %v2801 = vadd.f32 %v2767, %v377
        %v2802 = vmax.f32 %v2770, 0.0
        %v2803 = vmax.f32 %v2771, 0.0
        %v2804 = vmax.f32 %v2772, 0.0
        %v2805 = vmax.f32 %v2773, 0.0
        %v2806 = vmax.f32 %v2774, 0.0
        %v2807 = vmax.f32 %v2775, 0.0
        %v2808 = vmax.f32 %v2776, 0.0
        %v2809 = vmax.f32 %v2777, 0.0
        %v2810 = vmax.f32 %v2778, 0.0
        %v2811 = vmax.f32 %v2779, 0.0
        %v2812 = vmax.f32 %v2780, 0.0
        %v2813 = vmax.f32 %v2781, 0.0
        %v2814 = vmax.f32 %v2782, 0.0
        %v2815 = vmax.f32 %v2783, 0.0
        %v2816 = vmax.f32 %v2784, 0.0
        %v2817 = vmax.f32 %v2785, 0.0
        %v2818 = vmax.f32 %v2786, 0.0
        %v2819 = vmax.f32 %v2787, 0.0
        %v2820 = vmax.f32 %v2788, 0.0
        %v2821 = vmax.f32 %v2789, 0.0
        %v2822 = vmax.f32 %v2790, 0.0
        %v2823 = vmax.f32 %v2791, 0.0
        %v2824 = vmax.f32 %v2792, 0.0
        %v2825 = vmax.f32 %v2793, 0.0
        %v2826 = vmax.f32 %v2794, 0.0
        %v2827 = vmax.f32 %v2795, 0.0
        %v2828 = vmax.f32 %v2796, 0.0
        %v2829 = vmax.f32 %v2797, 0.0
        %v2830 = vmax.f32 %v2798, 0.0
        %v2831 = vmax.f32 %v2799, 0.0
        %v2832 = vmax.f32 %v2800, 0.0
        %v2833 = vmax.f32 %v2801, 0.0
        %2834 = vxpose.xlu0.b32.start [1/16] %v2802, 128
        %2835 = vxpose.xlu0.b32.cont [2/16] %v2803, 128
        %2836 = vxpose.xlu0.b32.cont [3/16] %v2804, 128
        %2837 = vxpose.xlu0.b32.cont [4/16] %v2805, 128
        %2838 = vxpose.xlu0.b32.cont [5/16] %v2806, 128
        %2839 = vxpose.xlu0.b32.cont [6/16] %v2807, 128
        %2840 = vxpose.xlu0.b32.cont [7/16] %v2808, 128
        %2841 = vxpose.xlu0.b32.cont [8/16] %v2809, 128
        %2842 = vxpose.xlu0.b32.cont [9/16] %v2810, 128
        %2843 = vxpose.xlu0.b32.cont [10/16] %v2811, 128
        %2844 = vxpose.xlu0.b32.cont [11/16] %v2812, 128
        %2845 = vxpose.xlu0.b32.cont [12/16] %v2813, 128
        %2846 = vxpose.xlu0.b32.cont [13/16] %v2814, 128
        %2847 = vxpose.xlu0.b32.cont [14/16] %v2815, 128
        %2848 = vxpose.xlu0.b32.cont [15/16] %v2816, 128
        %2849 = vxpose.xlu0.b32.end [16/16] %v2817, 128
        %v2850 = vpop.trf.xlu0
        %v2851 = vpop.trf.xlu0
        %v2852 = vpop.trf.xlu0
        %v2853 = vpop.trf.xlu0
        %v2854 = vpop.trf.xlu0
        %v2855 = vpop.trf.xlu0
        %v2856 = vpop.trf.xlu0
        %v2857 = vpop.trf.xlu0
        %v2858 = vpop.trf.xlu0
        %v2859 = vpop.trf.xlu0
        %v2860 = vpop.trf.xlu0
        %v2861 = vpop.trf.xlu0
        %v2862 = vpop.trf.xlu0
        %v2863 = vpop.trf.xlu0
        %v2864 = vpop.trf.xlu0
        %v2865 = vpop.trf.xlu0
        %2866 = vxpose.xlu0.b32.start [1/16] %v2818, 128
        %2867 = vxpose.xlu0.b32.cont [2/16] %v2819, 128
        %2868 = vxpose.xlu0.b32.cont [3/16] %v2820, 128
        %2869 = vxpose.xlu0.b32.cont [4/16] %v2821, 128
        %2870 = vxpose.xlu0.b32.cont [5/16] %v2822, 128
        %2871 = vxpose.xlu0.b32.cont [6/16] %v2823, 128
        %2872 = vxpose.xlu0.b32.cont [7/16] %v2824, 128
        %2873 = vxpose.xlu0.b32.cont [8/16] %v2825, 128
        %2874 = vxpose.xlu0.b32.cont [9/16] %v2826, 128
        %2875 = vxpose.xlu0.b32.cont [10/16] %v2827, 128
        %2876 = vxpose.xlu0.b32.cont [11/16] %v2828, 128
        %2877 = vxpose.xlu0.b32.cont [12/16] %v2829, 128
        %2878 = vxpose.xlu0.b32.cont [13/16] %v2830, 128
        %2879 = vxpose.xlu0.b32.cont [14/16] %v2831, 128
        %2880 = vxpose.xlu0.b32.cont [15/16] %v2832, 128
        %2881 = vxpose.xlu0.b32.end [16/16] %v2833, 128
        %v2882 = vpop.trf.xlu0
        %v2883 = vpop.trf.xlu0
        %v2884 = vpop.trf.xlu0
        %v2885 = vpop.trf.xlu0
        %v2886 = vpop.trf.xlu0
        %v2887 = vpop.trf.xlu0
        %v2888 = vpop.trf.xlu0
        %v2889 = vpop.trf.xlu0
        %v2890 = vpop.trf.xlu0
        %v2891 = vpop.trf.xlu0
        %v2892 = vpop.trf.xlu0
        %v2893 = vpop.trf.xlu0
        %v2894 = vpop.trf.xlu0
        %v2895 = vpop.trf.xlu0
        %v2896 = vpop.trf.xlu0
        %v2897 = vpop.trf.xlu0
        %2898 = vst [vmem:[%s296] sm:$0xff] %v2850
        %2899 = vst [vmem:[%s296 + $0x8] sm:$0xff] %v2882
        %2900 = vst [vmem:[%s296 + $0x10] sm:$0xff] %v2851
        %2901 = vst [vmem:[%s296 + $0x18] sm:$0xff] %v2883
        %2902 = vst [vmem:[%s296 + $0x20] sm:$0xff] %v2852
        %2903 = vst [vmem:[%s296 + $0x28] sm:$0xff] %v2884
        %2904 = vst [vmem:[%s296 + $0x30] sm:$0xff] %v2853
        %2905 = vst [vmem:[%s296 + $0x38] sm:$0xff] %v2885
        %2906 = vst [vmem:[%s296 + $0x40] sm:$0xff] %v2854
        %2907 = vst [vmem:[%s296 + $0x48] sm:$0xff] %v2886
        %2908 = vst [vmem:[%s296 + $0x50] sm:$0xff] %v2855
        %2909 = vst [vmem:[%s296 + $0x58] sm:$0xff] %v2887
        %2910 = vst [vmem:[%s296 + $0x60] sm:$0xff] %v2856
        %2911 = vst [vmem:[%s296 + $0x68] sm:$0xff] %v2888
        %2912 = vst [vmem:[%s296 + $0x70] sm:$0xff] %v2857
        %2913 = vst [vmem:[%s296 + $0x78] sm:$0xff] %v2889
        %s2914 = sand.u32 %s184, 1
        %s2915 = scalar_lea.sflag [#allocation5], %s2914
        %s2916 = sand.u32 %s184, 1
        %s2917 = smul.addr %s2916, 128
        %s2918 = scalar_lea.vmem [#allocation6], %s2917
        // Predicated region
        $region53: #{tpu_custom_call.1} parent=47 // pred_check
          %p2919 = pneg %p194
        $region54: #{tpu_custom_call.1} parent=47 // pred_check_branch
          %2921 = sbr.rel (%p2919) target = $region56
        $region55: #{tpu_custom_call.1} parent=47 // pred_region
          %s2923 = ssub.s32 2048, 2048
          %2924 = vsyncadd %s2915, %s2923
          %s2925 = smul.addr %s24, 16
          %s2926 = smul.addr %s2925, 128
          %s2927 = scalar_lea.hbm %s7, %s2926
          %s2928 = sshll.u32 %s2918, 4
          %s2929 = int_to_ptr.vmem [resolvable:$true] %s2928
          %2934 = dma.vmem_to_hbm [thread:$0]  %s2929, 2048, %s2927, %s2915, 256, 256, 16
        $region56: #{tpu_custom_call.1} parent=47 // pred_fallthru
          _
      $region48: #{tpu_custom_call.1} parent=5 // pred_fallthru
        _
      %p2935 = scmp.le.s32.totalorder 2, %s19
      // Predicated region
      $region57: #{tpu_custom_call.1} parent=5 // pred_check
        %p2936 = pneg %p2935
      $region58: #{tpu_custom_call.1} parent=5 // pred_check_branch
        %2938 = sbr.rel (%p2936) target = $region60
      $region59: #{tpu_custom_call.1} parent=5 // pred_region
        %s2939 = ssub.s32 %s19, 2
        // Predicated region
        $region61: #{tpu_custom_call.1} parent=59 // pred_check
          %p2940 = pneg %p200
        $region62: #{tpu_custom_call.1} parent=59 // pred_check_branch
          %2942 = sbr.rel (%p2940) target = $region64
        $region63: #{tpu_custom_call.1} parent=59 // pred_region
          %s2943 = sand.u32 %s185, 1
          %s2944 = scalar_lea.sflag [#allocation5], %s2943
          %s2945 = sand.u32 %s185, 1
          %s2946 = smul.addr %s2945, 128
          %s2947 = scalar_lea.vmem [#allocation6], %s2946
          %2948 = dma.done %s2944, 2048
        $region64: #{tpu_custom_call.1} parent=59 // pred_fallthru
          _
      $region60: #{tpu_custom_call.1} parent=5 // pred_fallthru
        _
    $region6: #{tpu_custom_call.1} parent=1 // loop_footer
      %s23 = sadd.s32 1, %s19
    $region7: #{tpu_custom_call.1} parent=1 // loop_footer_branch
      %18 = sbr.rel target = $region3
    $region8: #{tpu_custom_call.1} parent=1 // loop_exit
      _
    %2949 = vsyncpa [#allocation4], 1
    %s2950 = scalar_lea.sflag [#allocation4], 1
    %2951 = vsyncpa %s2950, 1
    %2952 = vsyncpa [#allocation5], 1
    %s2953 = scalar_lea.sflag [#allocation5], 1
    %2954 = vsyncpa %s2953, 1

</llo_original>
